<compile_context>
chip_gen: v7x
topology: tpu7x:2x2x1
jax: 0.10.0
libtpu: 0.0.40
codegen_flags: <defaults>
</compile_context>

<pallas_src>
import functools

import jax
import jax.numpy as jnp
from jax.experimental import pallas as pl
from jax.experimental.pallas import tpu as pltpu


_IN_FEATURES = 12 * 8 * 8   # 768
_H1_PAD = 128               # fc1 output padded 64 -> 128 (full lane / MXU column width)
_H7_PAD = 8                 # fc7 output padded 1 -> 8 (sublane-aligned matmul)
_TB = 256                   # batch tile (multiple of 128 and 16)


def _mlp_kernel(x_ref,
                w1, b1, w2, b2, w3, b3, w4, b4, w5, b5, w6, b6, w7, b7,
                o_ref):
    """Fused 7-layer MLP for one batch tile of shape (TB, 768)."""
    x = x_ref[...]
    # fc1 in (batch, feature) layout: (TB, 768) @ (768, 128) -> (TB, 128), f32 accum.
    h = jnp.dot(x, w1[...], preferred_element_type=jnp.float32) + b1[...]
    h = jnp.maximum(h, 0.0)

    # Flip to (feature, batch): batch on the 128-lane axis keeps the narrow tail
    # layers and the final store lane-dense.  (TB,128)->(128,TB) is a fully
    # (8,128)-aligned XLU transpose.
    h = h.T

    def dense_t(w_ref, b_ref, h):
        return jnp.dot(w_ref[...], h, preferred_element_type=jnp.float32) + b_ref[...]

    h = jnp.maximum(dense_t(w2, b2, h), 0.0)   # (64, TB)  (K padded to 128)
    h = jnp.maximum(dense_t(w3, b3, h), 0.0)   # (32, TB)
    h = jnp.maximum(dense_t(w4, b4, h), 0.0)   # (32, TB)
    h = jnp.maximum(dense_t(w5, b5, h), 0.0)   # (16, TB)
    h = jnp.maximum(dense_t(w6, b6, h), 0.0)   # (16, TB)
    out = dense_t(w7, b7, h)                   # (8, TB); only row 0 is real
    o_ref[...] = out[0:1, :]                   # lane-dense (1, TB) store


def init_params(key):
    """torch.nn.Linear-style init: U(-1/sqrt(fan_in), +1/sqrt(fan_in)).

    Weights stored in PyTorch convention (out_features, in_features)."""
    layer_dims = [(_IN_FEATURES, 64), (64, 64), (64, 32), (32, 32),
                  (32, 16), (16, 16), (16, 1)]
    params = []
    for (fan_in, fan_out) in layer_dims:
        key, kw, kb = jax.random.split(key, 3)
        bound = 1.0 / jnp.sqrt(float(fan_in))
        W = jax.random.uniform(kw, (fan_out, fan_in), jnp.float32, -bound, bound)
        b = jax.random.uniform(kb, (fan_out,), jnp.float32, -bound, bound)
        params.append((W, b))
    return params


def prepare_params(params, fc1_dtype=jnp.float32):
    """One-time (outside jit) conversion of PyTorch-layout params to kernel layout."""
    (W1, b1) = params[0]
    w1_k = jnp.zeros((_IN_FEATURES, _H1_PAD), jnp.float32).at[:, :W1.shape[0]].set(W1.T)
    b1_k = jnp.zeros((1, _H1_PAD), jnp.float32).at[0, :W1.shape[0]].set(b1)
    kp = [w1_k.astype(fc1_dtype), b1_k]

    (W2, b2) = params[1]
    # Pad fc2's contraction dim 64 -> 128 to match padded fc1 output (extra rows are 0).
    w2_k = jnp.zeros((W2.shape[0], _H1_PAD), jnp.float32).at[:, :W2.shape[1]].set(W2)
    kp += [w2_k, b2.reshape(-1, 1)]

    for (W, b) in params[2:-1]:
        kp += [W, b.reshape(-1, 1)]            # native (out, in); bias as column

    (W7, b7) = params[-1]
    w7_k = jnp.zeros((_H7_PAD, W7.shape[1]), jnp.float32).at[0, :].set(W7[0])
    b7_k = jnp.zeros((_H7_PAD, 1), jnp.float32).at[0, 0].set(b7[0])
    kp += [w7_k, b7_k]
    return tuple(kp)


@functools.partial(jax.jit, static_argnames=("tb",))
def chess_net_forward(x, kparams, tb=_TB):
    """x: (B, 12, 8, 8) float32 (NCHW).  Returns (B, 1) float32."""
    B = x.shape[0]
    assert tb % 128 == 0 and tb % 16 == 0
    flat = x.reshape(B, _IN_FEATURES).astype(kparams[0].dtype)

    n_tiles = pl.cdiv(B, tb)
    b_pad = n_tiles * tb
    if b_pad != B:
        flat = jnp.pad(flat, ((0, b_pad - B), (0, 0)))

    in_specs = [pl.BlockSpec((tb, _IN_FEATURES), lambda i: (i, 0))]
    in_specs += [pl.BlockSpec(p.shape, lambda i: (0, 0)) for p in kparams]
    out_spec = pl.BlockSpec((1, tb), lambda i: (0, i))

    dims = [(_IN_FEATURES, 64), (64, 64), (64, 32), (32, 32), (32, 16), (16, 16), (16, 1)]
    flops = 2 * B * sum(fi * fo for fi, fo in dims)
    bytes_accessed = (b_pad * _IN_FEATURES * flat.dtype.itemsize
                      + sum(int(p.size) * p.dtype.itemsize for p in kparams)
                      + b_pad * 4)

    out = pl.pallas_call(
        _mlp_kernel,
        out_shape=jax.ShapeDtypeStruct((1, b_pad), jnp.float32),
        grid=(n_tiles,),
        in_specs=in_specs,
        out_specs=out_spec,
        compiler_params=pltpu.CompilerParams(
            dimension_semantics=("parallel",)),
        cost_estimate=pl.CostEstimate(flops=flops, transcendentals=0,
                                      bytes_accessed=bytes_accessed),
    )(flat, *kparams)
    return out.reshape(b_pad, 1)[:B]


def reference_forward(x, params):
    """Plain-JAX reference mirroring the PyTorch forward."""
    B = x.shape[0]
    h = x.reshape(B, -1).astype(jnp.float32)
    for idx, (W, b) in enumerate(params):
        h = h @ W.T + b
        if idx < len(params) - 1:
            h = jnp.maximum(h, 0.0)
    return h


if __name__ == "__main__":
    key = jax.random.PRNGKey(0)
    key, kx = jax.random.split(key)

    params = init_params(key)
    kparams = prepare_params(params)                       # f32 path

    # Small-shape check (single tile).
    B = 2
    x = jax.random.normal(kx, (B, 12, 8, 8), dtype=jnp.float32)
    y = jax.block_until_ready(chess_net_forward(x, kparams))
    y_ref = reference_forward(x, params)
    assert y.shape == (B, 1), y.shape
    assert jnp.allclose(y, y_ref, atol=1e-2, rtol=1e-2), (y, y_ref)

    # Multi-tile batch: exercises grid pipelining and ragged-tail padding.
    key, kx2 = jax.random.split(key)
    B2 = 300                                               # pads to 2 tiles of 256
    x2 = jax.random.normal(kx2, (B2, 12, 8, 8), dtype=jnp.float32)
    y2 = jax.block_until_ready(chess_net_forward(x2, kparams))
    y2_ref = reference_forward(x2, params)
    assert y2.shape == (B2, 1), y2.shape
    assert jnp.allclose(y2, y2_ref, atol=1e-2, rtol=1e-2)

    # bf16 fc1 stream (halves HBM traffic on v5e/v6e); looser numerical tolerance.
    kparams_bf16 = prepare_params(params, fc1_dtype=jnp.bfloat16)
    y3 = jax.block_until_ready(chess_net_forward(x2, kparams_bf16))
    assert y3.shape == (B2, 1), y3.shape
    assert jnp.allclose(y3, y2_ref, atol=7e-2, rtol=7e-2)

    print("KERNEL_OK")
</pallas_src>

<mosaic_0001>
module attributes {stable_mosaic.version = 11 : i64} {
  func.func @_mlp_kernel(%arg0: i32, %arg1: memref<256x768xf32, #tpu.memory_space<vmem>>, %arg2: memref<768x128xf32, #tpu.memory_space<vmem>>, %arg3: memref<1x128xf32, #tpu.memory_space<vmem>>, %arg4: memref<64x128xf32, #tpu.memory_space<vmem>>, %arg5: memref<64x1xf32, #tpu.memory_space<vmem>>, %arg6: memref<32x64xf32, #tpu.memory_space<vmem>>, %arg7: memref<32x1xf32, #tpu.memory_space<vmem>>, %arg8: memref<32x32xf32, #tpu.memory_space<vmem>>, %arg9: memref<32x1xf32, #tpu.memory_space<vmem>>, %arg10: memref<16x32xf32, #tpu.memory_space<vmem>>, %arg11: memref<16x1xf32, #tpu.memory_space<vmem>>, %arg12: memref<16x16xf32, #tpu.memory_space<vmem>>, %arg13: memref<16x1xf32, #tpu.memory_space<vmem>>, %arg14: memref<8x16xf32, #tpu.memory_space<vmem>>, %arg15: memref<8x1xf32, #tpu.memory_space<vmem>>, %arg16: memref<1x256xf32, #tpu.memory_space<vmem>>) attributes {dimension_semantics = [#tpu.dimension_semantics<parallel>], iteration_bounds = array<i64: 1>, scalar_prefetch = 0 : i64, scratch_operands = 0 : i64, tpu.core_type = #tpu.core_type<tc>, window_params = [{transform_indices = @transform_0, window_bounds = array<i64: 256, 768>}, {pipeline_mode = #tpu.pipeline_mode<synchronous>, transform_indices = @transform_1, window_bounds = array<i64: 768, 128>}, {pipeline_mode = #tpu.pipeline_mode<synchronous>, transform_indices = @transform_2, window_bounds = array<i64: 1, 128>}, {pipeline_mode = #tpu.pipeline_mode<synchronous>, transform_indices = @transform_3, window_bounds = array<i64: 64, 128>}, {pipeline_mode = #tpu.pipeline_mode<synchronous>, transform_indices = @transform_4, window_bounds = array<i64: 64, 1>}, {pipeline_mode = #tpu.pipeline_mode<synchronous>, transform_indices = @transform_5, window_bounds = array<i64: 32, 64>}, {pipeline_mode = #tpu.pipeline_mode<synchronous>, transform_indices = @transform_6, window_bounds = array<i64: 32, 1>}, {pipeline_mode = #tpu.pipeline_mode<synchronous>, transform_indices = @transform_7, window_bounds = array<i64: 32, 32>}, {pipeline_mode = #tpu.pipeline_mode<synchronous>, transform_indices = @transform_8, window_bounds = array<i64: 32, 1>}, {pipeline_mode = #tpu.pipeline_mode<synchronous>, transform_indices = @transform_9, window_bounds = array<i64: 16, 32>}, {pipeline_mode = #tpu.pipeline_mode<synchronous>, transform_indices = @transform_10, window_bounds = array<i64: 16, 1>}, {pipeline_mode = #tpu.pipeline_mode<synchronous>, transform_indices = @transform_11, window_bounds = array<i64: 16, 16>}, {pipeline_mode = #tpu.pipeline_mode<synchronous>, transform_indices = @transform_12, window_bounds = array<i64: 16, 1>}, {pipeline_mode = #tpu.pipeline_mode<synchronous>, transform_indices = @transform_13, window_bounds = array<i64: 8, 16>}, {pipeline_mode = #tpu.pipeline_mode<synchronous>, transform_indices = @transform_14, window_bounds = array<i64: 8, 1>}, {transform_indices = @transform_15, window_bounds = array<i64: 1, 256>}]} {
    %c0 = arith.constant 0 : index
    %c0_0 = arith.constant 0 : index
    %0 = vector.load %arg1[%c0, %c0_0] : memref<256x768xf32, #tpu.memory_space<vmem>>, vector<256x768xf32>
    %c0_1 = arith.constant 0 : index
    %c0_2 = arith.constant 0 : index
    %1 = vector.load %arg2[%c0_1, %c0_2] : memref<768x128xf32, #tpu.memory_space<vmem>>, vector<768x128xf32>
    %cst = arith.constant dense<0.000000e+00> : vector<256x128xf32>
    %2 = tpu.matmul %0, %1, %cst {dimension_numbers = #tpu.dot_dimension_numbers<[1], [0], [0], [1], [0, 0, 1, 1], [], []>} : vector<256x768xf32>, vector<768x128xf32>, vector<256x128xf32> -> vector<256x128xf32>
    %c0_3 = arith.constant 0 : index
    %c0_4 = arith.constant 0 : index
    %3 = vector.load %arg3[%c0_3, %c0_4] : memref<1x128xf32, #tpu.memory_space<vmem>>, vector<1x128xf32>
    %4 = vector.broadcast %3 : vector<1x128xf32> to vector<256x128xf32>
    %5 = arith.addf %2, %4 : vector<256x128xf32>
    %cst_5 = arith.constant 0.000000e+00 : f32
    %6 = vector.broadcast %cst_5 : f32 to vector<256x128xf32>
    %7 = arith.maximumf %5, %6 : vector<256x128xf32>
    %8 = tpu.transpose %7, [1, 0] : vector<256x128xf32> -> vector<128x256xf32>
    %c0_6 = arith.constant 0 : index
    %c0_7 = arith.constant 0 : index
    %9 = vector.load %arg4[%c0_6, %c0_7] : memref<64x128xf32, #tpu.memory_space<vmem>>, vector<64x128xf32>
    %cst_8 = arith.constant dense<0.000000e+00> : vector<64x256xf32>
    %10 = tpu.matmul %9, %8, %cst_8 {dimension_numbers = #tpu.dot_dimension_numbers<[1], [0], [0], [1], [0, 0, 1, 1], [], []>} : vector<64x128xf32>, vector<128x256xf32>, vector<64x256xf32> -> vector<64x256xf32>
    %c0_9 = arith.constant 0 : index
    %c0_10 = arith.constant 0 : index
    %11 = vector.load %arg5[%c0_9, %c0_10] : memref<64x1xf32, #tpu.memory_space<vmem>>, vector<64x1xf32>
    %12 = vector.broadcast %11 : vector<64x1xf32> to vector<64x256xf32>
    %13 = arith.addf %10, %12 : vector<64x256xf32>
    %cst_11 = arith.constant 0.000000e+00 : f32
    %14 = vector.broadcast %cst_11 : f32 to vector<64x256xf32>
    %15 = arith.maximumf %13, %14 : vector<64x256xf32>
    %c0_12 = arith.constant 0 : index
    %c0_13 = arith.constant 0 : index
    %16 = vector.load %arg6[%c0_12, %c0_13] : memref<32x64xf32, #tpu.memory_space<vmem>>, vector<32x64xf32>
    %cst_14 = arith.constant dense<0.000000e+00> : vector<32x256xf32>
    %17 = tpu.matmul %16, %15, %cst_14 {dimension_numbers = #tpu.dot_dimension_numbers<[1], [0], [0], [1], [0, 0, 1, 1], [], []>} : vector<32x64xf32>, vector<64x256xf32>, vector<32x256xf32> -> vector<32x256xf32>
    %c0_15 = arith.constant 0 : index
    %c0_16 = arith.constant 0 : index
    %18 = vector.load %arg7[%c0_15, %c0_16] : memref<32x1xf32, #tpu.memory_space<vmem>>, vector<32x1xf32>
    %19 = vector.broadcast %18 : vector<32x1xf32> to vector<32x256xf32>
    %20 = arith.addf %17, %19 : vector<32x256xf32>
    %cst_17 = arith.constant 0.000000e+00 : f32
    %21 = vector.broadcast %cst_17 : f32 to vector<32x256xf32>
    %22 = arith.maximumf %20, %21 : vector<32x256xf32>
    %c0_18 = arith.constant 0 : index
    %c0_19 = arith.constant 0 : index
    %23 = vector.load %arg8[%c0_18, %c0_19] : memref<32x32xf32, #tpu.memory_space<vmem>>, vector<32x32xf32>
    %cst_20 = arith.constant dense<0.000000e+00> : vector<32x256xf32>
    %24 = tpu.matmul %23, %22, %cst_20 {dimension_numbers = #tpu.dot_dimension_numbers<[1], [0], [0], [1], [0, 0, 1, 1], [], []>} : vector<32x32xf32>, vector<32x256xf32>, vector<32x256xf32> -> vector<32x256xf32>
    %c0_21 = arith.constant 0 : index
    %c0_22 = arith.constant 0 : index
    %25 = vector.load %arg9[%c0_21, %c0_22] : memref<32x1xf32, #tpu.memory_space<vmem>>, vector<32x1xf32>
    %26 = vector.broadcast %25 : vector<32x1xf32> to vector<32x256xf32>
    %27 = arith.addf %24, %26 : vector<32x256xf32>
    %cst_23 = arith.constant 0.000000e+00 : f32
    %28 = vector.broadcast %cst_23 : f32 to vector<32x256xf32>
    %29 = arith.maximumf %27, %28 : vector<32x256xf32>
    %c0_24 = arith.constant 0 : index
    %c0_25 = arith.constant 0 : index
    %30 = vector.load %arg10[%c0_24, %c0_25] : memref<16x32xf32, #tpu.memory_space<vmem>>, vector<16x32xf32>
    %cst_26 = arith.constant dense<0.000000e+00> : vector<16x256xf32>
    %31 = tpu.matmul %30, %29, %cst_26 {dimension_numbers = #tpu.dot_dimension_numbers<[1], [0], [0], [1], [0, 0, 1, 1], [], []>} : vector<16x32xf32>, vector<32x256xf32>, vector<16x256xf32> -> vector<16x256xf32>
    %c0_27 = arith.constant 0 : index
    %c0_28 = arith.constant 0 : index
    %32 = vector.load %arg11[%c0_27, %c0_28] : memref<16x1xf32, #tpu.memory_space<vmem>>, vector<16x1xf32>
    %33 = vector.broadcast %32 : vector<16x1xf32> to vector<16x256xf32>
    %34 = arith.addf %31, %33 : vector<16x256xf32>
    %cst_29 = arith.constant 0.000000e+00 : f32
    %35 = vector.broadcast %cst_29 : f32 to vector<16x256xf32>
    %36 = arith.maximumf %34, %35 : vector<16x256xf32>
    %c0_30 = arith.constant 0 : index
    %c0_31 = arith.constant 0 : index
    %37 = vector.load %arg12[%c0_30, %c0_31] : memref<16x16xf32, #tpu.memory_space<vmem>>, vector<16x16xf32>
    %cst_32 = arith.constant dense<0.000000e+00> : vector<16x256xf32>
    %38 = tpu.matmul %37, %36, %cst_32 {dimension_numbers = #tpu.dot_dimension_numbers<[1], [0], [0], [1], [0, 0, 1, 1], [], []>} : vector<16x16xf32>, vector<16x256xf32>, vector<16x256xf32> -> vector<16x256xf32>
    %c0_33 = arith.constant 0 : index
    %c0_34 = arith.constant 0 : index
    %39 = vector.load %arg13[%c0_33, %c0_34] : memref<16x1xf32, #tpu.memory_space<vmem>>, vector<16x1xf32>
    %40 = vector.broadcast %39 : vector<16x1xf32> to vector<16x256xf32>
    %41 = arith.addf %38, %40 : vector<16x256xf32>
    %cst_35 = arith.constant 0.000000e+00 : f32
    %42 = vector.broadcast %cst_35 : f32 to vector<16x256xf32>
    %43 = arith.maximumf %41, %42 : vector<16x256xf32>
    %c0_36 = arith.constant 0 : index
    %c0_37 = arith.constant 0 : index
    %44 = vector.load %arg14[%c0_36, %c0_37] : memref<8x16xf32, #tpu.memory_space<vmem>>, vector<8x16xf32>
    %cst_38 = arith.constant dense<0.000000e+00> : vector<8x256xf32>
    %45 = tpu.matmul %44, %43, %cst_38 {dimension_numbers = #tpu.dot_dimension_numbers<[1], [0], [0], [1], [0, 0, 1, 1], [], []>} : vector<8x16xf32>, vector<16x256xf32>, vector<8x256xf32> -> vector<8x256xf32>
    %c0_39 = arith.constant 0 : index
    %c0_40 = arith.constant 0 : index
    %46 = vector.load %arg15[%c0_39, %c0_40] : memref<8x1xf32, #tpu.memory_space<vmem>>, vector<8x1xf32>
    %47 = vector.broadcast %46 : vector<8x1xf32> to vector<8x256xf32>
    %48 = arith.addf %45, %47 : vector<8x256xf32>
    %49 = vector.extract_strided_slice %48 {offsets = [0, 0], sizes = [1, 256], strides = [1, 1]} : vector<8x256xf32> to vector<1x256xf32>
    %c0_41 = arith.constant 0 : index
    %c0_42 = arith.constant 0 : index
    %50 = vector.load %arg16[%c0_41, %c0_42] : memref<1x256xf32, #tpu.memory_space<vmem>>, vector<1x256xf32>
    tpu.vector_store %arg16[%c0_41, %c0_42], %49 {strides = array<i32>} : memref<1x256xf32, #tpu.memory_space<vmem>>, vector<1x256xf32>,
    return
  }
  func.func @transform_0(%arg0: i32) -> (i32, i32) {
    %c0_i32 = arith.constant 0 : i32
    %c0_i32_0 = arith.constant 0 : i32
    return %arg0, %c0_i32 : i32, i32
  }
  func.func @transform_1(%arg0: i32) -> (i32, i32) {
    %c0_i32 = arith.constant 0 : i32
    %c0_i32_0 = arith.constant 0 : i32
    %c0_i32_1 = arith.constant 0 : i32
    return %c0_i32, %c0_i32_0 : i32, i32
  }
  func.func @transform_2(%arg0: i32) -> (i32, i32) {
    %c0_i32 = arith.constant 0 : i32
    %c0_i32_0 = arith.constant 0 : i32
    %c0_i32_1 = arith.constant 0 : i32
    return %c0_i32, %c0_i32_0 : i32, i32
  }
  func.func @transform_3(%arg0: i32) -> (i32, i32) {
    %c0_i32 = arith.constant 0 : i32
    %c0_i32_0 = arith.constant 0 : i32
    %c0_i32_1 = arith.constant 0 : i32
    return %c0_i32, %c0_i32_0 : i32, i32
  }
  func.func @transform_4(%arg0: i32) -> (i32, i32) {
    %c0_i32 = arith.constant 0 : i32
    %c0_i32_0 = arith.constant 0 : i32
    %c0_i32_1 = arith.constant 0 : i32
    return %c0_i32, %c0_i32_0 : i32, i32
  }
  func.func @transform_5(%arg0: i32) -> (i32, i32) {
    %c0_i32 = arith.constant 0 : i32
    %c0_i32_0 = arith.constant 0 : i32
    %c0_i32_1 = arith.constant 0 : i32
    return %c0_i32, %c0_i32_0 : i32, i32
  }
  func.func @transform_6(%arg0: i32) -> (i32, i32) {
    %c0_i32 = arith.constant 0 : i32
    %c0_i32_0 = arith.constant 0 : i32
    %c0_i32_1 = arith.constant 0 : i32
    return %c0_i32, %c0_i32_0 : i32, i32
  }
  func.func @transform_7(%arg0: i32) -> (i32, i32) {
    %c0_i32 = arith.constant 0 : i32
    %c0_i32_0 = arith.constant 0 : i32
    %c0_i32_1 = arith.constant 0 : i32
    return %c0_i32, %c0_i32_0 : i32, i32
  }
  func.func @transform_8(%arg0: i32) -> (i32, i32) {
    %c0_i32 = arith.constant 0 : i32
    %c0_i32_0 = arith.constant 0 : i32
    %c0_i32_1 = arith.constant 0 : i32
    return %c0_i32, %c0_i32_0 : i32, i32
  }
  func.func @transform_9(%arg0: i32) -> (i32, i32) {
    %c0_i32 = arith.constant 0 : i32
    %c0_i32_0 = arith.constant 0 : i32
    %c0_i32_1 = arith.constant 0 : i32
    return %c0_i32, %c0_i32_0 : i32, i32
  }
  func.func @transform_10(%arg0: i32) -> (i32, i32) {
    %c0_i32 = arith.constant 0 : i32
    %c0_i32_0 = arith.constant 0 : i32
    %c0_i32_1 = arith.constant 0 : i32
    return %c0_i32, %c0_i32_0 : i32, i32
  }
  func.func @transform_11(%arg0: i32) -> (i32, i32) {
    %c0_i32 = arith.constant 0 : i32
    %c0_i32_0 = arith.constant 0 : i32
    %c0_i32_1 = arith.constant 0 : i32
    return %c0_i32, %c0_i32_0 : i32, i32
  }
  func.func @transform_12(%arg0: i32) -> (i32, i32) {
    %c0_i32 = arith.constant 0 : i32
    %c0_i32_0 = arith.constant 0 : i32
    %c0_i32_1 = arith.constant 0 : i32
    return %c0_i32, %c0_i32_0 : i32, i32
  }
  func.func @transform_13(%arg0: i32) -> (i32, i32) {
    %c0_i32 = arith.constant 0 : i32
    %c0_i32_0 = arith.constant 0 : i32
    %c0_i32_1 = arith.constant 0 : i32
    return %c0_i32, %c0_i32_0 : i32, i32
  }
  func.func @transform_14(%arg0: i32) -> (i32, i32) {
    %c0_i32 = arith.constant 0 : i32
    %c0_i32_0 = arith.constant 0 : i32
    %c0_i32_1 = arith.constant 0 : i32
    return %c0_i32, %c0_i32_0 : i32, i32
  }
  func.func @transform_15(%arg0: i32) -> (i32, i32) {
    %c0_i32 = arith.constant 0 : i32
    %c0_i32_0 = arith.constant 0 : i32
    return %c0_i32, %arg0 : i32, i32
  }
}

</mosaic_0001>

<llo_original>
// kernel: chess_net_forward.1
$region0: #{chess_net_forward.1}
  #allocation0 [shape = 'u32[]', space=smem, size = 0x4, offset = 0x4, fixed_abs, tag = 'smem constant byte address 0x4 - core index']
  #allocation1 [shape = 'u32[144,128]{1,0:T(1,128)}', space=vmem, size = 0x12000, scoped, tag = 'internal scratch']
  %s0 = inlined_call_operand.vmem [shape: f32[256,768], index: 0, kind: input, shape index: {}]
  %s1 = inlined_call_operand.vmem [shape: f32[768,128], index: 1, kind: input, shape index: {}]
  %s2 = inlined_call_operand.vmem [shape: f32[1,128], index: 2, kind: input, shape index: {}]
  %s3 = inlined_call_operand.vmem [shape: f32[64,128], index: 3, kind: input, shape index: {}]
  %s4 = inlined_call_operand.vmem [shape: f32[64,1], index: 4, kind: input, shape index: {}]
  %s5 = inlined_call_operand.vmem [shape: f32[32,64], index: 5, kind: input, shape index: {}]
  %s6 = inlined_call_operand.vmem [shape: f32[32,1], index: 6, kind: input, shape index: {}]
  %s7 = inlined_call_operand.vmem [shape: f32[32,32], index: 7, kind: input, shape index: {}]
  %s8 = inlined_call_operand.vmem [shape: f32[32,1], index: 8, kind: input, shape index: {}]
  %s9 = inlined_call_operand.vmem [shape: f32[16,32], index: 9, kind: input, shape index: {}]
  %s10 = inlined_call_operand.vmem [shape: f32[16,1], index: 10, kind: input, shape index: {}]
  %s11 = inlined_call_operand.vmem [shape: f32[16,16], index: 11, kind: input, shape index: {}]
  %s12 = inlined_call_operand.vmem [shape: f32[16,1], index: 12, kind: input, shape index: {}]
  %s13 = inlined_call_operand.vmem [shape: f32[8,16], index: 13, kind: input, shape index: {}]
  %s14 = inlined_call_operand.vmem [shape: f32[8,1], index: 14, kind: input, shape index: {}]
  %s15 = inlined_call_operand.vmem [shape: f32[1,256], index: 15, kind: output, shape index: {}]
  %s16 = sld [smem:[#allocation0]]
  $region70: #{chess_net_forward.1} parent=0
    _
  %s18 = ssub.s32 1, %s16
  %s19 = scalar_select 0, %s18, %s16
  // Predicated region
  $region2: #{chess_net_forward.1} parent=0 // pred_check
    _
  $region3: #{chess_net_forward.1} parent=0 // pred_check_branch
    %21 = sbr.rel (0) target = $region5
  $region4: #{chess_net_forward.1} parent=0 // pred_region
    _
  $region5: #{chess_net_forward.1} parent=0 // pred_fallthru
    _
  // Predicated region
  $region6: #{chess_net_forward.1} parent=0 // pred_check
    _
  $region7: #{chess_net_forward.1} parent=0 // pred_check_branch
    %23 = sbr.rel (0) target = $region9
  $region8: #{chess_net_forward.1} parent=0 // pred_region
    _
  $region9: #{chess_net_forward.1} parent=0 // pred_fallthru
    _
  // Predicated region
  $region10: #{chess_net_forward.1} parent=0 // pred_check
    _
  $region11: #{chess_net_forward.1} parent=0 // pred_check_branch
    %25 = sbr.rel (0) target = $region13
  $region12: #{chess_net_forward.1} parent=0 // pred_region
    _
  $region13: #{chess_net_forward.1} parent=0 // pred_fallthru
    _
  // Predicated region
  $region14: #{chess_net_forward.1} parent=0 // pred_check
    _
  $region15: #{chess_net_forward.1} parent=0 // pred_check_branch
    %27 = sbr.rel (0) target = $region17
  $region16: #{chess_net_forward.1} parent=0 // pred_region
    _
  $region17: #{chess_net_forward.1} parent=0 // pred_fallthru
    _
  // Predicated region
  $region18: #{chess_net_forward.1} parent=0 // pred_check
    _
  $region19: #{chess_net_forward.1} parent=0 // pred_check_branch
    %29 = sbr.rel (0) target = $region21
  $region20: #{chess_net_forward.1} parent=0 // pred_region
    _
  $region21: #{chess_net_forward.1} parent=0 // pred_fallthru
    _
  // Predicated region
  $region22: #{chess_net_forward.1} parent=0 // pred_check
    _
  $region23: #{chess_net_forward.1} parent=0 // pred_check_branch
    %31 = sbr.rel (0) target = $region25
  $region24: #{chess_net_forward.1} parent=0 // pred_region
    _
  $region25: #{chess_net_forward.1} parent=0 // pred_fallthru
    _
  // Predicated region
  $region26: #{chess_net_forward.1} parent=0 // pred_check
    _
  $region27: #{chess_net_forward.1} parent=0 // pred_check_branch
    %33 = sbr.rel (0) target = $region29
  $region28: #{chess_net_forward.1} parent=0 // pred_region
    _
  $region29: #{chess_net_forward.1} parent=0 // pred_fallthru
    _
  // Predicated region
  $region30: #{chess_net_forward.1} parent=0 // pred_check
    _
  $region31: #{chess_net_forward.1} parent=0 // pred_check_branch
    %35 = sbr.rel (0) target = $region33
  $region32: #{chess_net_forward.1} parent=0 // pred_region
    _
  $region33: #{chess_net_forward.1} parent=0 // pred_fallthru
    _
  // Predicated region
  $region34: #{chess_net_forward.1} parent=0 // pred_check
    _
  $region35: #{chess_net_forward.1} parent=0 // pred_check_branch
    %37 = sbr.rel (0) target = $region37
  $region36: #{chess_net_forward.1} parent=0 // pred_region
    _
  $region37: #{chess_net_forward.1} parent=0 // pred_fallthru
    _
  // Predicated region
  $region38: #{chess_net_forward.1} parent=0 // pred_check
    _
  $region39: #{chess_net_forward.1} parent=0 // pred_check_branch
    %39 = sbr.rel (0) target = $region41
  $region40: #{chess_net_forward.1} parent=0 // pred_region
    _
  $region41: #{chess_net_forward.1} parent=0 // pred_fallthru
    _
  // Predicated region
  $region42: #{chess_net_forward.1} parent=0 // pred_check
    _
  $region43: #{chess_net_forward.1} parent=0 // pred_check_branch
    %41 = sbr.rel (0) target = $region45
  $region44: #{chess_net_forward.1} parent=0 // pred_region
    _
  $region45: #{chess_net_forward.1} parent=0 // pred_fallthru
    _
  // Predicated region
  $region46: #{chess_net_forward.1} parent=0 // pred_check
    _
  $region47: #{chess_net_forward.1} parent=0 // pred_check_branch
    %43 = sbr.rel (0) target = $region49
  $region48: #{chess_net_forward.1} parent=0 // pred_region
    _
  $region49: #{chess_net_forward.1} parent=0 // pred_fallthru
    _
  // Predicated region
  $region50: #{chess_net_forward.1} parent=0 // pred_check
    _
  $region51: #{chess_net_forward.1} parent=0 // pred_check_branch
    %45 = sbr.rel (0) target = $region53
  $region52: #{chess_net_forward.1} parent=0 // pred_region
    _
  $region53: #{chess_net_forward.1} parent=0 // pred_fallthru
    _
  // Predicated region
  $region54: #{chess_net_forward.1} parent=0 // pred_check
    _
  $region55: #{chess_net_forward.1} parent=0 // pred_check_branch
    %47 = sbr.rel (0) target = $region57
  $region56: #{chess_net_forward.1} parent=0 // pred_region
    _
  $region57: #{chess_net_forward.1} parent=0 // pred_fallthru
    _
  // Predicated region
  $region58: #{chess_net_forward.1} parent=0 // pred_check
    _
  $region59: #{chess_net_forward.1} parent=0 // pred_check_branch
    %49 = sbr.rel (0) target = $region61
  $region60: #{chess_net_forward.1} parent=0 // pred_region
    _
  $region61: #{chess_net_forward.1} parent=0 // pred_fallthru
    _
  %v50 = vld [vmem:[%s0] sm:$0xff]
  %v51 = vld [vmem:[%s0 + $0x8] sm:$0xff]
  %v52 = vld [vmem:[%s0 + $0x10] sm:$0xff]
  %v53 = vld [vmem:[%s0 + $0x18] sm:$0xff]
  %v54 = vld [vmem:[%s0 + $0x20] sm:$0xff]
  %v55 = vld [vmem:[%s0 + $0x28] sm:$0xff]
  %v56 = vld [vmem:[%s0 + $0x30] sm:$0xff]
  %v57 = vld [vmem:[%s0 + $0x38] sm:$0xff]
  %v58 = vld [vmem:[%s0 + $0x40] sm:$0xff]
  %v59 = vld [vmem:[%s0 + $0x48] sm:$0xff]
  %v60 = vld [vmem:[%s0 + $0x50] sm:$0xff]
  %v61 = vld [vmem:[%s0 + $0x58] sm:$0xff]
  %v62 = vld [vmem:[%s0 + $0x60] sm:$0xff]
  %v63 = vld [vmem:[%s0 + $0x68] sm:$0xff]
  %v64 = vld [vmem:[%s0 + $0x70] sm:$0xff]
  %v65 = vld [vmem:[%s0 + $0x78] sm:$0xff]
  %v66 = vld [vmem:[%s0 + $0x80] sm:$0xff]
  %v67 = vld [vmem:[%s0 + $0x88] sm:$0xff]
  %v68 = vld [vmem:[%s0 + $0x90] sm:$0xff]
  %v69 = vld [vmem:[%s0 + $0x98] sm:$0xff]
  %v70 = vld [vmem:[%s0 + $0xa0] sm:$0xff]
  %v71 = vld [vmem:[%s0 + $0xa8] sm:$0xff]
  %v72 = vld [vmem:[%s0 + $0xb0] sm:$0xff]
  %v73 = vld [vmem:[%s0 + $0xb8] sm:$0xff]
  %v74 = vld [vmem:[%s0 + $0xc0] sm:$0xff]
  %v75 = vld [vmem:[%s0 + $0xc8] sm:$0xff]
  %v76 = vld [vmem:[%s0 + $0xd0] sm:$0xff]
  %v77 = vld [vmem:[%s0 + $0xd8] sm:$0xff]
  %v78 = vld [vmem:[%s0 + $0xe0] sm:$0xff]
  %v79 = vld [vmem:[%s0 + $0xe8] sm:$0xff]
  %v80 = vld [vmem:[%s0 + $0xf0] sm:$0xff]
  %v81 = vld [vmem:[%s0 + $0xf8] sm:$0xff]
  %v82 = vld [vmem:[%s0 + $0x100] sm:$0xff]
  %v83 = vld [vmem:[%s0 + $0x108] sm:$0xff]
  %v84 = vld [vmem:[%s0 + $0x110] sm:$0xff]
  %v85 = vld [vmem:[%s0 + $0x118] sm:$0xff]
  %v86 = vld [vmem:[%s0 + $0x120] sm:$0xff]
  %v87 = vld [vmem:[%s0 + $0x128] sm:$0xff]
  %v88 = vld [vmem:[%s0 + $0x130] sm:$0xff]
  %v89 = vld [vmem:[%s0 + $0x138] sm:$0xff]
  %v90 = vld [vmem:[%s0 + $0x140] sm:$0xff]
  %v91 = vld [vmem:[%s0 + $0x148] sm:$0xff]
  %v92 = vld [vmem:[%s0 + $0x150] sm:$0xff]
  %v93 = vld [vmem:[%s0 + $0x158] sm:$0xff]
  %v94 = vld [vmem:[%s0 + $0x160] sm:$0xff]
  %v95 = vld [vmem:[%s0 + $0x168] sm:$0xff]
  %v96 = vld [vmem:[%s0 + $0x170] sm:$0xff]
  %v97 = vld [vmem:[%s0 + $0x178] sm:$0xff]
  %v98 = vld [vmem:[%s0 + $0x180] sm:$0xff]
  %v99 = vld [vmem:[%s0 + $0x188] sm:$0xff]
  %v100 = vld [vmem:[%s0 + $0x190] sm:$0xff]
  %v101 = vld [vmem:[%s0 + $0x198] sm:$0xff]
  %v102 = vld [vmem:[%s0 + $0x1a0] sm:$0xff]
  %v103 = vld [vmem:[%s0 + $0x1a8] sm:$0xff]
  %v104 = vld [vmem:[%s0 + $0x1b0] sm:$0xff]
  %v105 = vld [vmem:[%s0 + $0x1b8] sm:$0xff]
  %v106 = vld [vmem:[%s0 + $0x1c0] sm:$0xff]
  %v107 = vld [vmem:[%s0 + $0x1c8] sm:$0xff]
  %v108 = vld [vmem:[%s0 + $0x1d0] sm:$0xff]
  %v109 = vld [vmem:[%s0 + $0x1d8] sm:$0xff]
  %v110 = vld [vmem:[%s0 + $0x1e0] sm:$0xff]
  %v111 = vld [vmem:[%s0 + $0x1e8] sm:$0xff]
  %v112 = vld [vmem:[%s0 + $0x1f0] sm:$0xff]
  %v113 = vld [vmem:[%s0 + $0x1f8] sm:$0xff]
  %v114 = vld [vmem:[%s0 + $0x200] sm:$0xff]
  %v115 = vld [vmem:[%s0 + $0x208] sm:$0xff]
  %v116 = vld [vmem:[%s0 + $0x210] sm:$0xff]
  %v117 = vld [vmem:[%s0 + $0x218] sm:$0xff]
  %v118 = vld [vmem:[%s0 + $0x220] sm:$0xff]
  %v119 = vld [vmem:[%s0 + $0x228] sm:$0xff]
  %v120 = vld [vmem:[%s0 + $0x230] sm:$0xff]
  %v121 = vld [vmem:[%s0 + $0x238] sm:$0xff]
  %v122 = vld [vmem:[%s0 + $0x240] sm:$0xff]
  %v123 = vld [vmem:[%s0 + $0x248] sm:$0xff]
  %v124 = vld [vmem:[%s0 + $0x250] sm:$0xff]
  %v125 = vld [vmem:[%s0 + $0x258] sm:$0xff]
  %v126 = vld [vmem:[%s0 + $0x260] sm:$0xff]
  %v127 = vld [vmem:[%s0 + $0x268] sm:$0xff]
  %v128 = vld [vmem:[%s0 + $0x270] sm:$0xff]
  %v129 = vld [vmem:[%s0 + $0x278] sm:$0xff]
  %v130 = vld [vmem:[%s0 + $0x280] sm:$0xff]
  %v131 = vld [vmem:[%s0 + $0x288] sm:$0xff]
  %v132 = vld [vmem:[%s0 + $0x290] sm:$0xff]
  %v133 = vld [vmem:[%s0 + $0x298] sm:$0xff]
  %v134 = vld [vmem:[%s0 + $0x2a0] sm:$0xff]
  %v135 = vld [vmem:[%s0 + $0x2a8] sm:$0xff]
  %v136 = vld [vmem:[%s0 + $0x2b0] sm:$0xff]
  %v137 = vld [vmem:[%s0 + $0x2b8] sm:$0xff]
  %v138 = vld [vmem:[%s0 + $0x2c0] sm:$0xff]
  %v139 = vld [vmem:[%s0 + $0x2c8] sm:$0xff]
  %v140 = vld [vmem:[%s0 + $0x2d0] sm:$0xff]
  %v141 = vld [vmem:[%s0 + $0x2d8] sm:$0xff]
  %v142 = vld [vmem:[%s0 + $0x2e0] sm:$0xff]
  %v143 = vld [vmem:[%s0 + $0x2e8] sm:$0xff]
  %v144 = vld [vmem:[%s0 + $0x2f0] sm:$0xff]
  %v145 = vld [vmem:[%s0 + $0x2f8] sm:$0xff]
  %v146 = vld [vmem:[%s0 + $0x300] sm:$0xff]
  %v147 = vld [vmem:[%s0 + $0x308] sm:$0xff]
  %v148 = vld [vmem:[%s0 + $0x310] sm:$0xff]
  %v149 = vld [vmem:[%s0 + $0x318] sm:$0xff]
  %v150 = vld [vmem:[%s0 + $0x320] sm:$0xff]
  %v151 = vld [vmem:[%s0 + $0x328] sm:$0xff]
  %v152 = vld [vmem:[%s0 + $0x330] sm:$0xff]
  %v153 = vld [vmem:[%s0 + $0x338] sm:$0xff]
  %v154 = vld [vmem:[%s0 + $0x340] sm:$0xff]
  %v155 = vld [vmem:[%s0 + $0x348] sm:$0xff]
  %v156 = vld [vmem:[%s0 + $0x350] sm:$0xff]
  %v157 = vld [vmem:[%s0 + $0x358] sm:$0xff]
  %v158 = vld [vmem:[%s0 + $0x360] sm:$0xff]
  %v159 = vld [vmem:[%s0 + $0x368] sm:$0xff]
  %v160 = vld [vmem:[%s0 + $0x370] sm:$0xff]
  %v161 = vld [vmem:[%s0 + $0x378] sm:$0xff]
  %v162 = vld [vmem:[%s0 + $0x380] sm:$0xff]
  %v163 = vld [vmem:[%s0 + $0x388] sm:$0xff]
  %v164 = vld [vmem:[%s0 + $0x390] sm:$0xff]
  %v165 = vld [vmem:[%s0 + $0x398] sm:$0xff]
  %v166 = vld [vmem:[%s0 + $0x3a0] sm:$0xff]
  %v167 = vld [vmem:[%s0 + $0x3a8] sm:$0xff]
  %v168 = vld [vmem:[%s0 + $0x3b0] sm:$0xff]
  %v169 = vld [vmem:[%s0 + $0x3b8] sm:$0xff]
  %v170 = vld [vmem:[%s0 + $0x3c0] sm:$0xff]
  %v171 = vld [vmem:[%s0 + $0x3c8] sm:$0xff]
  %v172 = vld [vmem:[%s0 + $0x3d0] sm:$0xff]
  %v173 = vld [vmem:[%s0 + $0x3d8] sm:$0xff]
  %v174 = vld [vmem:[%s0 + $0x3e0] sm:$0xff]
  %v175 = vld [vmem:[%s0 + $0x3e8] sm:$0xff]
  %v176 = vld [vmem:[%s0 + $0x3f0] sm:$0xff]
  %v177 = vld [vmem:[%s0 + $0x3f8] sm:$0xff]
  %v178 = vld [vmem:[%s0 + $0x400] sm:$0xff]
  %v179 = vld [vmem:[%s0 + $0x408] sm:$0xff]
  %v180 = vld [vmem:[%s0 + $0x410] sm:$0xff]
  %v181 = vld [vmem:[%s0 + $0x418] sm:$0xff]
  %v182 = vld [vmem:[%s0 + $0x420] sm:$0xff]
  %v183 = vld [vmem:[%s0 + $0x428] sm:$0xff]
  %v184 = vld [vmem:[%s0 + $0x430] sm:$0xff]
  %v185 = vld [vmem:[%s0 + $0x438] sm:$0xff]
  %v186 = vld [vmem:[%s0 + $0x440] sm:$0xff]
  %v187 = vld [vmem:[%s0 + $0x448] sm:$0xff]
  %v188 = vld [vmem:[%s0 + $0x450] sm:$0xff]
  %v189 = vld [vmem:[%s0 + $0x458] sm:$0xff]
  %v190 = vld [vmem:[%s0 + $0x460] sm:$0xff]
  %v191 = vld [vmem:[%s0 + $0x468] sm:$0xff]
  %v192 = vld [vmem:[%s0 + $0x470] sm:$0xff]
  %v193 = vld [vmem:[%s0 + $0x478] sm:$0xff]
  %v194 = vld [vmem:[%s0 + $0x480] sm:$0xff]
  %v195 = vld [vmem:[%s0 + $0x488] sm:$0xff]
  %v196 = vld [vmem:[%s0 + $0x490] sm:$0xff]
  %v197 = vld [vmem:[%s0 + $0x498] sm:$0xff]
  %v198 = vld [vmem:[%s0 + $0x4a0] sm:$0xff]
  %v199 = vld [vmem:[%s0 + $0x4a8] sm:$0xff]
  %v200 = vld [vmem:[%s0 + $0x4b0] sm:$0xff]
  %v201 = vld [vmem:[%s0 + $0x4b8] sm:$0xff]
  %v202 = vld [vmem:[%s0 + $0x4c0] sm:$0xff]
  %v203 = vld [vmem:[%s0 + $0x4c8] sm:$0xff]
  %v204 = vld [vmem:[%s0 + $0x4d0] sm:$0xff]
  %v205 = vld [vmem:[%s0 + $0x4d8] sm:$0xff]
  %v206 = vld [vmem:[%s0 + $0x4e0] sm:$0xff]
  %v207 = vld [vmem:[%s0 + $0x4e8] sm:$0xff]
  %v208 = vld [vmem:[%s0 + $0x4f0] sm:$0xff]
  %v209 = vld [vmem:[%s0 + $0x4f8] sm:$0xff]
  %v210 = vld [vmem:[%s0 + $0x500] sm:$0xff]
  %v211 = vld [vmem:[%s0 + $0x508] sm:$0xff]
  %v212 = vld [vmem:[%s0 + $0x510] sm:$0xff]
  %v213 = vld [vmem:[%s0 + $0x518] sm:$0xff]
  %v214 = vld [vmem:[%s0 + $0x520] sm:$0xff]
  %v215 = vld [vmem:[%s0 + $0x528] sm:$0xff]
  %v216 = vld [vmem:[%s0 + $0x530] sm:$0xff]
  %v217 = vld [vmem:[%s0 + $0x538] sm:$0xff]
  %v218 = vld [vmem:[%s0 + $0x540] sm:$0xff]
  %v219 = vld [vmem:[%s0 + $0x548] sm:$0xff]
  %v220 = vld [vmem:[%s0 + $0x550] sm:$0xff]
  %v221 = vld [vmem:[%s0 + $0x558] sm:$0xff]
  %v222 = vld [vmem:[%s0 + $0x560] sm:$0xff]
  %v223 = vld [vmem:[%s0 + $0x568] sm:$0xff]
  %v224 = vld [vmem:[%s0 + $0x570] sm:$0xff]
  %v225 = vld [vmem:[%s0 + $0x578] sm:$0xff]
  %v226 = vld [vmem:[%s0 + $0x580] sm:$0xff]
  %v227 = vld [vmem:[%s0 + $0x588] sm:$0xff]
  %v228 = vld [vmem:[%s0 + $0x590] sm:$0xff]
  %v229 = vld [vmem:[%s0 + $0x598] sm:$0xff]
  %v230 = vld [vmem:[%s0 + $0x5a0] sm:$0xff]
  %v231 = vld [vmem:[%s0 + $0x5a8] sm:$0xff]
  %v232 = vld [vmem:[%s0 + $0x5b0] sm:$0xff]
  %v233 = vld [vmem:[%s0 + $0x5b8] sm:$0xff]
  %v234 = vld [vmem:[%s0 + $0x5c0] sm:$0xff]
  %v235 = vld [vmem:[%s0 + $0x5c8] sm:$0xff]
  %v236 = vld [vmem:[%s0 + $0x5d0] sm:$0xff]
  %v237 = vld [vmem:[%s0 + $0x5d8] sm:$0xff]
  %v238 = vld [vmem:[%s0 + $0x5e0] sm:$0xff]
  %v239 = vld [vmem:[%s0 + $0x5e8] sm:$0xff]
  %v240 = vld [vmem:[%s0 + $0x5f0] sm:$0xff]
  %v241 = vld [vmem:[%s0 + $0x5f8] sm:$0xff]
  %v242 = vld [vmem:[%s1] sm:$0xff]
  %v243 = vld [vmem:[%s1 + $0x8] sm:$0xff]
  %v244 = vld [vmem:[%s1 + $0x10] sm:$0xff]
  %v245 = vld [vmem:[%s1 + $0x18] sm:$0xff]
  %v246 = vld [vmem:[%s1 + $0x20] sm:$0xff]
  %v247 = vld [vmem:[%s1 + $0x28] sm:$0xff]
  %v248 = vld [vmem:[%s1 + $0x30] sm:$0xff]
  %v249 = vld [vmem:[%s1 + $0x38] sm:$0xff]
  %v250 = vld [vmem:[%s1 + $0x40] sm:$0xff]
  %v251 = vld [vmem:[%s1 + $0x48] sm:$0xff]
  %v252 = vld [vmem:[%s1 + $0x50] sm:$0xff]
  %v253 = vld [vmem:[%s1 + $0x58] sm:$0xff]
  %v254 = vld [vmem:[%s1 + $0x60] sm:$0xff]
  %v255 = vld [vmem:[%s1 + $0x68] sm:$0xff]
  %v256 = vld [vmem:[%s1 + $0x70] sm:$0xff]
  %v257 = vld [vmem:[%s1 + $0x78] sm:$0xff]
  %v258 = vld [vmem:[%s1 + $0x80] sm:$0xff]
  %v259 = vld [vmem:[%s1 + $0x88] sm:$0xff]
  %v260 = vld [vmem:[%s1 + $0x90] sm:$0xff]
  %v261 = vld [vmem:[%s1 + $0x98] sm:$0xff]
  %v262 = vld [vmem:[%s1 + $0xa0] sm:$0xff]
  %v263 = vld [vmem:[%s1 + $0xa8] sm:$0xff]
  %v264 = vld [vmem:[%s1 + $0xb0] sm:$0xff]
  %v265 = vld [vmem:[%s1 + $0xb8] sm:$0xff]
  %v266 = vld [vmem:[%s1 + $0xc0] sm:$0xff]
  %v267 = vld [vmem:[%s1 + $0xc8] sm:$0xff]
  %v268 = vld [vmem:[%s1 + $0xd0] sm:$0xff]
  %v269 = vld [vmem:[%s1 + $0xd8] sm:$0xff]
  %v270 = vld [vmem:[%s1 + $0xe0] sm:$0xff]
  %v271 = vld [vmem:[%s1 + $0xe8] sm:$0xff]
  %v272 = vld [vmem:[%s1 + $0xf0] sm:$0xff]
  %v273 = vld [vmem:[%s1 + $0xf8] sm:$0xff]
  %v274 = vld [vmem:[%s1 + $0x100] sm:$0xff]
  %v275 = vld [vmem:[%s1 + $0x108] sm:$0xff]
  %v276 = vld [vmem:[%s1 + $0x110] sm:$0xff]
  %v277 = vld [vmem:[%s1 + $0x118] sm:$0xff]
  %v278 = vld [vmem:[%s1 + $0x120] sm:$0xff]
  %v279 = vld [vmem:[%s1 + $0x128] sm:$0xff]
  %v280 = vld [vmem:[%s1 + $0x130] sm:$0xff]
  %v281 = vld [vmem:[%s1 + $0x138] sm:$0xff]
  %v282 = vld [vmem:[%s1 + $0x140] sm:$0xff]
  %v283 = vld [vmem:[%s1 + $0x148] sm:$0xff]
  %v284 = vld [vmem:[%s1 + $0x150] sm:$0xff]
  %v285 = vld [vmem:[%s1 + $0x158] sm:$0xff]
  %v286 = vld [vmem:[%s1 + $0x160] sm:$0xff]
  %v287 = vld [vmem:[%s1 + $0x168] sm:$0xff]
  %v288 = vld [vmem:[%s1 + $0x170] sm:$0xff]
  %v289 = vld [vmem:[%s1 + $0x178] sm:$0xff]
  %v290 = vld [vmem:[%s1 + $0x180] sm:$0xff]
  %v291 = vld [vmem:[%s1 + $0x188] sm:$0xff]
  %v292 = vld [vmem:[%s1 + $0x190] sm:$0xff]
  %v293 = vld [vmem:[%s1 + $0x198] sm:$0xff]
  %v294 = vld [vmem:[%s1 + $0x1a0] sm:$0xff]
  %v295 = vld [vmem:[%s1 + $0x1a8] sm:$0xff]
  %v296 = vld [vmem:[%s1 + $0x1b0] sm:$0xff]
  %v297 = vld [vmem:[%s1 + $0x1b8] sm:$0xff]
  %v298 = vld [vmem:[%s1 + $0x1c0] sm:$0xff]
  %v299 = vld [vmem:[%s1 + $0x1c8] sm:$0xff]
  %v300 = vld [vmem:[%s1 + $0x1d0] sm:$0xff]
  %v301 = vld [vmem:[%s1 + $0x1d8] sm:$0xff]
  %v302 = vld [vmem:[%s1 + $0x1e0] sm:$0xff]
  %v303 = vld [vmem:[%s1 + $0x1e8] sm:$0xff]
  %v304 = vld [vmem:[%s1 + $0x1f0] sm:$0xff]
  %v305 = vld [vmem:[%s1 + $0x1f8] sm:$0xff]
  %v306 = vld [vmem:[%s1 + $0x200] sm:$0xff]
  %v307 = vld [vmem:[%s1 + $0x208] sm:$0xff]
  %v308 = vld [vmem:[%s1 + $0x210] sm:$0xff]
  %v309 = vld [vmem:[%s1 + $0x218] sm:$0xff]
  %v310 = vld [vmem:[%s1 + $0x220] sm:$0xff]
  %v311 = vld [vmem:[%s1 + $0x228] sm:$0xff]
  %v312 = vld [vmem:[%s1 + $0x230] sm:$0xff]
  %v313 = vld [vmem:[%s1 + $0x238] sm:$0xff]
  %v314 = vld [vmem:[%s1 + $0x240] sm:$0xff]
  %v315 = vld [vmem:[%s1 + $0x248] sm:$0xff]
  %v316 = vld [vmem:[%s1 + $0x250] sm:$0xff]
  %v317 = vld [vmem:[%s1 + $0x258] sm:$0xff]
  %v318 = vld [vmem:[%s1 + $0x260] sm:$0xff]
  %v319 = vld [vmem:[%s1 + $0x268] sm:$0xff]
  %v320 = vld [vmem:[%s1 + $0x270] sm:$0xff]
  %v321 = vld [vmem:[%s1 + $0x278] sm:$0xff]
  %v322 = vld [vmem:[%s1 + $0x280] sm:$0xff]
  %v323 = vld [vmem:[%s1 + $0x288] sm:$0xff]
  %v324 = vld [vmem:[%s1 + $0x290] sm:$0xff]
  %v325 = vld [vmem:[%s1 + $0x298] sm:$0xff]
  %v326 = vld [vmem:[%s1 + $0x2a0] sm:$0xff]
  %v327 = vld [vmem:[%s1 + $0x2a8] sm:$0xff]
  %v328 = vld [vmem:[%s1 + $0x2b0] sm:$0xff]
  %v329 = vld [vmem:[%s1 + $0x2b8] sm:$0xff]
  %v330 = vld [vmem:[%s1 + $0x2c0] sm:$0xff]
  %v331 = vld [vmem:[%s1 + $0x2c8] sm:$0xff]
  %v332 = vld [vmem:[%s1 + $0x2d0] sm:$0xff]
  %v333 = vld [vmem:[%s1 + $0x2d8] sm:$0xff]
  %v334 = vld [vmem:[%s1 + $0x2e0] sm:$0xff]
  %v335 = vld [vmem:[%s1 + $0x2e8] sm:$0xff]
  %v336 = vld [vmem:[%s1 + $0x2f0] sm:$0xff]
  %v337 = vld [vmem:[%s1 + $0x2f8] sm:$0xff]
  %v338 = vld [vmem:[%s2] sm:$0x1]
  %v340 = vlaneseq
  %v341 = vshrl.u32 %v340, 7
  %v342 = vsub.s32 0, %v341
  %v343 = vrot.slane %v338, %v342
  %345 = vmatprep.subr.mxu0 0.0
  %346 = vmatpush1.msra.mxu0 %v242
  %347 = vmatprep.subr.mxu0 0.0
  %348 = vmatpush1.msra.mxu0 %v243
  %349 = vmatprep.subr.mxu0 0.0
  %350 = vmatpush1.msra.mxu0 %v244
  %351 = vmatprep.subr.mxu0 0.0
  %352 = vmatpush1.msra.mxu0 %v245
  %353 = vmatprep.subr.mxu0 0.0
  %354 = vmatpush1.msra.mxu0 %v246
  %355 = vmatprep.subr.mxu0 0.0
  %356 = vmatpush1.msra.mxu0 %v247
  %357 = vmatprep.subr.mxu0 0.0
  %358 = vmatpush1.msra.mxu0 %v248
  %359 = vmatprep.subr.mxu0 0.0
  %360 = vmatpush1.msra.mxu0 %v249
  %361 = vmatprep.subr.mxu0 0.0
  %362 = vmatpush1.msra.mxu0 %v250
  %363 = vmatprep.subr.mxu0 0.0
  %364 = vmatpush1.msra.mxu0 %v251
  %365 = vmatprep.subr.mxu0 0.0
  %366 = vmatpush1.msra.mxu0 %v252
  %367 = vmatprep.subr.mxu0 0.0
  %368 = vmatpush1.msra.mxu0 %v253
  %369 = vmatprep.subr.mxu0 0.0
  %370 = vmatpush1.msra.mxu0 %v254
  %371 = vmatprep.subr.mxu0 0.0
  %372 = vmatpush1.msra.mxu0 %v255
  %373 = vmatprep.subr.mxu0 0.0
  %374 = vmatpush1.msra.mxu0 %v256
  %375 = vmatprep.subr.mxu0 0.0
  %376 = vmatpush1.msra.mxu0 %v257
  %377 = vmatprep.subr.mxu0 0.0
  %378 = vmatpush1.msra.mxu0 %v258
  %379 = vmatprep.subr.mxu0 0.0
  %380 = vmatpush1.msra.mxu0 %v259
  %381 = vmatprep.subr.mxu0 0.0
  %382 = vmatpush1.msra.mxu0 %v260
  %383 = vmatprep.subr.mxu0 0.0
  %384 = vmatpush1.msra.mxu0 %v261
  %385 = vmatprep.subr.mxu0 0.0
  %386 = vmatpush1.msra.mxu0 %v262
  %387 = vmatprep.subr.mxu0 0.0
  %388 = vmatpush1.msra.mxu0 %v263
  %389 = vmatprep.subr.mxu0 0.0
  %390 = vmatpush1.msra.mxu0 %v264
  %391 = vmatprep.subr.mxu0 0.0
  %392 = vmatpush1.msra.mxu0 %v265
  %393 = vmatprep.subr.mxu0 0.0
  %394 = vmatpush1.msra.mxu0 %v266
  %395 = vmatprep.subr.mxu0 0.0
  %396 = vmatpush1.msra.mxu0 %v267
  %397 = vmatprep.subr.mxu0 0.0
  %398 = vmatpush1.msra.mxu0 %v268
  %399 = vmatprep.subr.mxu0 0.0
  %400 = vmatpush1.msra.mxu0 %v269
  %401 = vmatprep.subr.mxu0 0.0
  %402 = vmatpush1.msra.mxu0 %v270
  %403 = vmatprep.subr.mxu0 0.0
  %404 = vmatpush1.msra.mxu0 %v271
  %405 = vmatprep.subr.mxu0 0.0
  %406 = vmatpush1.msra.mxu0 %v272
  %407 = vmatprep.subr.mxu0 0.0
  %408 = vmatpush1.msra.mxu0 %v273
  %409 = vmatprep.mubr.f32.mxu0 %v51
  %410 = vmatmul.mubr.f32.gmra.mrb[0].mxu0 %v50
  %v411 = vpop.f32.mrb[0].mxu0
  %v412 = vadd.f32 %v343, %v411
  %v413 = vpop.f32.mrb[0].mxu0
  %414 = vmatprep.mubr.f32.mxu0 %v57
  %415 = vmatmul.mubr.f32.gmra.mrb[0].mxu0 %v56
  %v416 = vpop.f32.mrb[0].mxu0
  %v417 = vadd.f32 %v343, %v416
  %v418 = vpop.f32.mrb[0].mxu0
  %419 = vmatprep.mubr.f32.mxu0 %v63
  %420 = vmatmul.mubr.f32.gmra.mrb[0].mxu0 %v62
  %v421 = vpop.f32.mrb[0].mxu0
  %v422 = vadd.f32 %v343, %v421
  %v423 = vpop.f32.mrb[0].mxu0
  %424 = vmatprep.mubr.f32.mxu0 %v69
  %425 = vmatmul.mubr.f32.gmra.mrb[0].mxu0 %v68
  %v426 = vpop.f32.mrb[0].mxu0
  %v427 = vadd.f32 %v343, %v426
  %v428 = vpop.f32.mrb[0].mxu0
  %429 = vmatprep.mubr.f32.mxu0 %v75
  %430 = vmatmul.mubr.f32.gmra.mrb[0].mxu0 %v74
  %v431 = vpop.f32.mrb[0].mxu0
  %v432 = vadd.f32 %v343, %v431
  %v433 = vpop.f32.mrb[0].mxu0
  %434 = vmatprep.mubr.f32.mxu0 %v81
  %435 = vmatmul.mubr.f32.gmra.mrb[0].mxu0 %v80
  %v436 = vpop.f32.mrb[0].mxu0
  %v437 = vadd.f32 %v343, %v436
  %v438 = vpop.f32.mrb[0].mxu0
  %439 = vmatprep.mubr.f32.mxu0 %v87
  %440 = vmatmul.mubr.f32.gmra.mrb[0].mxu0 %v86
  %v441 = vpop.f32.mrb[0].mxu0
  %v442 = vadd.f32 %v343, %v441
  %v443 = vpop.f32.mrb[0].mxu0
  %444 = vmatprep.mubr.f32.mxu0 %v93
  %445 = vmatmul.mubr.f32.gmra.mrb[0].mxu0 %v92
  %v446 = vpop.f32.mrb[0].mxu0
  %v447 = vadd.f32 %v343, %v446
  %v448 = vpop.f32.mrb[0].mxu0
  %449 = vmatprep.mubr.f32.mxu0 %v99
  %450 = vmatmul.mubr.f32.gmra.mrb[0].mxu0 %v98
  %v451 = vpop.f32.mrb[0].mxu0
  %v452 = vadd.f32 %v343, %v451
  %v453 = vpop.f32.mrb[0].mxu0
  %454 = vmatprep.mubr.f32.mxu0 %v105
  %455 = vmatmul.mubr.f32.gmra.mrb[0].mxu0 %v104
  %v456 = vpop.f32.mrb[0].mxu0
  %v457 = vadd.f32 %v343, %v456
  %v458 = vpop.f32.mrb[0].mxu0
  %459 = vmatprep.mubr.f32.mxu0 %v111
  %460 = vmatmul.mubr.f32.gmra.mrb[0].mxu0 %v110
  %v461 = vpop.f32.mrb[0].mxu0
  %v462 = vadd.f32 %v343, %v461
  %v463 = vpop.f32.mrb[0].mxu0
  %464 = vmatprep.mubr.f32.mxu0 %v117
  %465 = vmatmul.mubr.f32.gmra.mrb[0].mxu0 %v116
  %v466 = vpop.f32.mrb[0].mxu0
  %v467 = vadd.f32 %v343, %v466
  %v468 = vpop.f32.mrb[0].mxu0
  %469 = vmatprep.mubr.f32.mxu0 %v123
  %470 = vmatmul.mubr.f32.gmra.mrb[0].mxu0 %v122
  %v471 = vpop.f32.mrb[0].mxu0
  %v472 = vadd.f32 %v343, %v471
  %v473 = vpop.f32.mrb[0].mxu0
  %474 = vmatprep.mubr.f32.mxu0 %v129
  %475 = vmatmul.mubr.f32.gmra.mrb[0].mxu0 %v128
  %v476 = vpop.f32.mrb[0].mxu0
  %v477 = vadd.f32 %v343, %v476
  %v478 = vpop.f32.mrb[0].mxu0
  %479 = vmatprep.mubr.f32.mxu0 %v135
  %480 = vmatmul.mubr.f32.gmra.mrb[0].mxu0 %v134
  %v481 = vpop.f32.mrb[0].mxu0
  %v482 = vadd.f32 %v343, %v481
  %v483 = vpop.f32.mrb[0].mxu0
  %484 = vmatprep.mubr.f32.mxu0 %v141
  %485 = vmatmul.mubr.f32.gmra.mrb[0].mxu0 %v140
  %v486 = vpop.f32.mrb[0].mxu0
  %v487 = vadd.f32 %v343, %v486
  %v488 = vpop.f32.mrb[0].mxu0
  %489 = vmatprep.mubr.f32.mxu0 %v147
  %490 = vmatmul.mubr.f32.gmra.mrb[0].mxu0 %v146
  %v491 = vpop.f32.mrb[0].mxu0
  %v492 = vadd.f32 %v343, %v491
  %v493 = vpop.f32.mrb[0].mxu0
  %494 = vmatprep.mubr.f32.mxu0 %v153
  %495 = vmatmul.mubr.f32.gmra.mrb[0].mxu0 %v152
  %v496 = vpop.f32.mrb[0].mxu0
  %v497 = vadd.f32 %v343, %v496
  %v498 = vpop.f32.mrb[0].mxu0
  %499 = vmatprep.mubr.f32.mxu0 %v159
  %500 = vmatmul.mubr.f32.gmra.mrb[0].mxu0 %v158
  %v501 = vpop.f32.mrb[0].mxu0
  %v502 = vadd.f32 %v343, %v501
  %v503 = vpop.f32.mrb[0].mxu0
  %504 = vmatprep.mubr.f32.mxu0 %v165
  %505 = vmatmul.mubr.f32.gmra.mrb[0].mxu0 %v164
  %v506 = vpop.f32.mrb[0].mxu0
  %v507 = vadd.f32 %v343, %v506
  %v508 = vpop.f32.mrb[0].mxu0
  %509 = vmatprep.mubr.f32.mxu0 %v171
  %510 = vmatmul.mubr.f32.gmra.mrb[0].mxu0 %v170
  %v511 = vpop.f32.mrb[0].mxu0
  %v512 = vadd.f32 %v343, %v511
  %v513 = vpop.f32.mrb[0].mxu0
  %514 = vmatprep.mubr.f32.mxu0 %v177
  %515 = vmatmul.mubr.f32.gmra.mrb[0].mxu0 %v176
  %v516 = vpop.f32.mrb[0].mxu0
  %v517 = vadd.f32 %v343, %v516
  %v518 = vpop.f32.mrb[0].mxu0
  %519 = vmatprep.mubr.f32.mxu0 %v183
  %520 = vmatmul.mubr.f32.gmra.mrb[0].mxu0 %v182
  %v521 = vpop.f32.mrb[0].mxu0
  %v522 = vadd.f32 %v343, %v521
  %v523 = vpop.f32.mrb[0].mxu0
  %524 = vmatprep.mubr.f32.mxu0 %v189
  %525 = vmatmul.mubr.f32.gmra.mrb[0].mxu0 %v188
  %v526 = vpop.f32.mrb[0].mxu0
  %v527 = vadd.f32 %v343, %v526
  %v528 = vpop.f32.mrb[0].mxu0
  %529 = vmatprep.mubr.f32.mxu0 %v195
  %530 = vmatmul.mubr.f32.gmra.mrb[0].mxu0 %v194
  %v531 = vpop.f32.mrb[0].mxu0
  %v532 = vadd.f32 %v343, %v531
  %v533 = vpop.f32.mrb[0].mxu0
  %534 = vmatprep.mubr.f32.mxu0 %v201
  %535 = vmatmul.mubr.f32.gmra.mrb[0].mxu0 %v200
  %v536 = vpop.f32.mrb[0].mxu0
  %v537 = vadd.f32 %v343, %v536
  %v538 = vpop.f32.mrb[0].mxu0
  %539 = vmatprep.mubr.f32.mxu0 %v207
  %540 = vmatmul.mubr.f32.gmra.mrb[0].mxu0 %v206
  %v541 = vpop.f32.mrb[0].mxu0
  %v542 = vadd.f32 %v343, %v541
  %v543 = vpop.f32.mrb[0].mxu0
  %544 = vmatprep.mubr.f32.mxu0 %v213
  %545 = vmatmul.mubr.f32.gmra.mrb[0].mxu0 %v212
  %v546 = vpop.f32.mrb[0].mxu0
  %v547 = vadd.f32 %v343, %v546
  %v548 = vpop.f32.mrb[0].mxu0
  %549 = vmatprep.mubr.f32.mxu0 %v219
  %550 = vmatmul.mubr.f32.gmra.mrb[0].mxu0 %v218
  %v551 = vpop.f32.mrb[0].mxu0
  %v552 = vadd.f32 %v343, %v551
  %v553 = vpop.f32.mrb[0].mxu0
  %554 = vmatprep.mubr.f32.mxu0 %v225
  %555 = vmatmul.mubr.f32.gmra.mrb[0].mxu0 %v224
  %v556 = vpop.f32.mrb[0].mxu0
  %v557 = vadd.f32 %v343, %v556
  %v558 = vpop.f32.mrb[0].mxu0
  %559 = vmatprep.mubr.f32.mxu0 %v231
  %560 = vmatmul.mubr.f32.gmra.mrb[0].mxu0 %v230
  %v561 = vpop.f32.mrb[0].mxu0
  %v562 = vadd.f32 %v343, %v561
  %v563 = vpop.f32.mrb[0].mxu0
  %564 = vmatprep.mubr.f32.mxu0 %v237
  %565 = vmatmul.mubr.f32.gmra.mrb[0].mxu0 %v236
  %v566 = vpop.f32.mrb[0].mxu0
  %v567 = vadd.f32 %v343, %v566
  %v568 = vpop.f32.mrb[0].mxu0
  %569 = vdwg.mxu0
  %570 = vmatprep.subr.mxu0 0.0
  %571 = vmatpush1.msra.mxu0 %v274
  %572 = vmatprep.subr.mxu0 0.0
  %573 = vmatpush1.msra.mxu0 %v275
  %574 = vmatprep.subr.mxu0 0.0
  %575 = vmatpush1.msra.mxu0 %v276
  %576 = vmatprep.subr.mxu0 0.0
  %577 = vmatpush1.msra.mxu0 %v277
  %578 = vmatprep.subr.mxu0 0.0
  %579 = vmatpush1.msra.mxu0 %v278
  %580 = vmatprep.subr.mxu0 0.0
  %581 = vmatpush1.msra.mxu0 %v279
  %582 = vmatprep.subr.mxu0 0.0
  %583 = vmatpush1.msra.mxu0 %v280
  %584 = vmatprep.subr.mxu0 0.0
  %585 = vmatpush1.msra.mxu0 %v281
  %586 = vmatprep.subr.mxu0 0.0
  %587 = vmatpush1.msra.mxu0 %v282
  %588 = vmatprep.subr.mxu0 0.0
  %589 = vmatpush1.msra.mxu0 %v283
  %590 = vmatprep.subr.mxu0 0.0
  %591 = vmatpush1.msra.mxu0 %v284
  %592 = vmatprep.subr.mxu0 0.0
  %593 = vmatpush1.msra.mxu0 %v285
  %594 = vmatprep.subr.mxu0 0.0
  %595 = vmatpush1.msra.mxu0 %v286
  %596 = vmatprep.subr.mxu0 0.0
  %597 = vmatpush1.msra.mxu0 %v287
  %598 = vmatprep.subr.mxu0 0.0
  %599 = vmatpush1.msra.mxu0 %v288
  %600 = vmatprep.subr.mxu0 0.0
  %601 = vmatpush1.msra.mxu0 %v289
  %602 = vmatprep.subr.mxu0 0.0
  %603 = vmatpush1.msra.mxu0 %v290
  %604 = vmatprep.subr.mxu0 0.0
  %605 = vmatpush1.msra.mxu0 %v291
  %606 = vmatprep.subr.mxu0 0.0
  %607 = vmatpush1.msra.mxu0 %v292
  %608 = vmatprep.subr.mxu0 0.0
  %609 = vmatpush1.msra.mxu0 %v293
  %610 = vmatprep.subr.mxu0 0.0
  %611 = vmatpush1.msra.mxu0 %v294
  %612 = vmatprep.subr.mxu0 0.0
  %613 = vmatpush1.msra.mxu0 %v295
  %614 = vmatprep.subr.mxu0 0.0
  %615 = vmatpush1.msra.mxu0 %v296
  %616 = vmatprep.subr.mxu0 0.0
  %617 = vmatpush1.msra.mxu0 %v297
  %618 = vmatprep.subr.mxu0 0.0
  %619 = vmatpush1.msra.mxu0 %v298
  %620 = vmatprep.subr.mxu0 0.0
  %621 = vmatpush1.msra.mxu0 %v299
  %622 = vmatprep.subr.mxu0 0.0
  %623 = vmatpush1.msra.mxu0 %v300
  %624 = vmatprep.subr.mxu0 0.0
  %625 = vmatpush1.msra.mxu0 %v301
  %626 = vmatprep.subr.mxu0 0.0
  %627 = vmatpush1.msra.mxu0 %v302
  %628 = vmatprep.subr.mxu0 0.0
  %629 = vmatpush1.msra.mxu0 %v303
  %630 = vmatprep.subr.mxu0 0.0
  %631 = vmatpush1.msra.mxu0 %v304
  %632 = vmatprep.subr.mxu0 0.0
  %633 = vmatpush1.msra.mxu0 %v305
  %634 = vmatprep.mubr.f32.mxu0 %v53
  %635 = vmatmul.mubr.f32.gmra.mrb[0].mxu0 %v52
  %v636 = vpop.f32.mrb[0].mxu0
  %v637 = vadd.f32 %v412, %v636
  %v638 = vpop.f32.mrb[0].mxu0
  %639 = vmatprep.mubr.f32.mxu0 %v59
  %640 = vmatmul.mubr.f32.gmra.mrb[0].mxu0 %v58
  %v641 = vpop.f32.mrb[0].mxu0
  %v642 = vadd.f32 %v417, %v641
  %v643 = vpop.f32.mrb[0].mxu0
  %644 = vmatprep.mubr.f32.mxu0 %v65
  %645 = vmatmul.mubr.f32.gmra.mrb[0].mxu0 %v64
  %v646 = vpop.f32.mrb[0].mxu0
  %v647 = vadd.f32 %v422, %v646
  %v648 = vpop.f32.mrb[0].mxu0
  %649 = vmatprep.mubr.f32.mxu0 %v71
  %650 = vmatmul.mubr.f32.gmra.mrb[0].mxu0 %v70
  %v651 = vpop.f32.mrb[0].mxu0
  %v652 = vadd.f32 %v427, %v651
  %v653 = vpop.f32.mrb[0].mxu0
  %654 = vmatprep.mubr.f32.mxu0 %v77
  %655 = vmatmul.mubr.f32.gmra.mrb[0].mxu0 %v76
  %v656 = vpop.f32.mrb[0].mxu0
  %v657 = vadd.f32 %v432, %v656
  %v658 = vpop.f32.mrb[0].mxu0
  %659 = vmatprep.mubr.f32.mxu0 %v83
  %660 = vmatmul.mubr.f32.gmra.mrb[0].mxu0 %v82
  %v661 = vpop.f32.mrb[0].mxu0
  %v662 = vadd.f32 %v437, %v661
  %v663 = vpop.f32.mrb[0].mxu0
  %664 = vmatprep.mubr.f32.mxu0 %v89
  %665 = vmatmul.mubr.f32.gmra.mrb[0].mxu0 %v88
  %v666 = vpop.f32.mrb[0].mxu0
  %v667 = vadd.f32 %v442, %v666
  %v668 = vpop.f32.mrb[0].mxu0
  %669 = vmatprep.mubr.f32.mxu0 %v95
  %670 = vmatmul.mubr.f32.gmra.mrb[0].mxu0 %v94
  %v671 = vpop.f32.mrb[0].mxu0
  %v672 = vadd.f32 %v447, %v671
  %v673 = vpop.f32.mrb[0].mxu0
  %674 = vmatprep.mubr.f32.mxu0 %v101
  %675 = vmatmul.mubr.f32.gmra.mrb[0].mxu0 %v100
  %v676 = vpop.f32.mrb[0].mxu0
  %v677 = vadd.f32 %v452, %v676
  %v678 = vpop.f32.mrb[0].mxu0
  %679 = vmatprep.mubr.f32.mxu0 %v107
  %680 = vmatmul.mubr.f32.gmra.mrb[0].mxu0 %v106
  %v681 = vpop.f32.mrb[0].mxu0
  %v682 = vadd.f32 %v457, %v681
  %v683 = vpop.f32.mrb[0].mxu0
  %684 = vmatprep.mubr.f32.mxu0 %v113
  %685 = vmatmul.mubr.f32.gmra.mrb[0].mxu0 %v112
  %v686 = vpop.f32.mrb[0].mxu0
  %v687 = vadd.f32 %v462, %v686
  %v688 = vpop.f32.mrb[0].mxu0
  %689 = vmatprep.mubr.f32.mxu0 %v119
  %690 = vmatmul.mubr.f32.gmra.mrb[0].mxu0 %v118
  %v691 = vpop.f32.mrb[0].mxu0
  %v692 = vadd.f32 %v467, %v691
  %v693 = vpop.f32.mrb[0].mxu0
  %694 = vmatprep.mubr.f32.mxu0 %v125
  %695 = vmatmul.mubr.f32.gmra.mrb[0].mxu0 %v124
  %v696 = vpop.f32.mrb[0].mxu0
  %v697 = vadd.f32 %v472, %v696
  %v698 = vpop.f32.mrb[0].mxu0
  %699 = vmatprep.mubr.f32.mxu0 %v131
  %700 = vmatmul.mubr.f32.gmra.mrb[0].mxu0 %v130
  %v701 = vpop.f32.mrb[0].mxu0
  %v702 = vadd.f32 %v477, %v701
  %v703 = vpop.f32.mrb[0].mxu0
  %704 = vmatprep.mubr.f32.mxu0 %v137
  %705 = vmatmul.mubr.f32.gmra.mrb[0].mxu0 %v136
  %v706 = vpop.f32.mrb[0].mxu0
  %v707 = vadd.f32 %v482, %v706
  %v708 = vpop.f32.mrb[0].mxu0
  %709 = vmatprep.mubr.f32.mxu0 %v143
  %710 = vmatmul.mubr.f32.gmra.mrb[0].mxu0 %v142
  %v711 = vpop.f32.mrb[0].mxu0
  %v712 = vadd.f32 %v487, %v711
  %v713 = vpop.f32.mrb[0].mxu0
  %714 = vmatprep.mubr.f32.mxu0 %v149
  %715 = vmatmul.mubr.f32.gmra.mrb[0].mxu0 %v148
  %v716 = vpop.f32.mrb[0].mxu0
  %v717 = vadd.f32 %v492, %v716
  %v718 = vpop.f32.mrb[0].mxu0
  %719 = vmatprep.mubr.f32.mxu0 %v155
  %720 = vmatmul.mubr.f32.gmra.mrb[0].mxu0 %v154
  %v721 = vpop.f32.mrb[0].mxu0
  %v722 = vadd.f32 %v497, %v721
  %v723 = vpop.f32.mrb[0].mxu0
  %724 = vmatprep.mubr.f32.mxu0 %v161
  %725 = vmatmul.mubr.f32.gmra.mrb[0].mxu0 %v160
  %v726 = vpop.f32.mrb[0].mxu0
  %v727 = vadd.f32 %v502, %v726
  %v728 = vpop.f32.mrb[0].mxu0
  %729 = vmatprep.mubr.f32.mxu0 %v167
  %730 = vmatmul.mubr.f32.gmra.mrb[0].mxu0 %v166
  %v731 = vpop.f32.mrb[0].mxu0
  %v732 = vadd.f32 %v507, %v731
  %v733 = vpop.f32.mrb[0].mxu0
  %734 = vmatprep.mubr.f32.mxu0 %v173
  %735 = vmatmul.mubr.f32.gmra.mrb[0].mxu0 %v172
  %v736 = vpop.f32.mrb[0].mxu0
  %v737 = vadd.f32 %v512, %v736
  %v738 = vpop.f32.mrb[0].mxu0
  %739 = vmatprep.mubr.f32.mxu0 %v179
  %740 = vmatmul.mubr.f32.gmra.mrb[0].mxu0 %v178
  %v741 = vpop.f32.mrb[0].mxu0
  %v742 = vadd.f32 %v517, %v741
  %v743 = vpop.f32.mrb[0].mxu0
  %744 = vmatprep.mubr.f32.mxu0 %v185
  %745 = vmatmul.mubr.f32.gmra.mrb[0].mxu0 %v184
  %v746 = vpop.f32.mrb[0].mxu0
  %v747 = vadd.f32 %v522, %v746
  %v748 = vpop.f32.mrb[0].mxu0
  %749 = vmatprep.mubr.f32.mxu0 %v191
  %750 = vmatmul.mubr.f32.gmra.mrb[0].mxu0 %v190
  %v751 = vpop.f32.mrb[0].mxu0
  %v752 = vadd.f32 %v527, %v751
  %v753 = vpop.f32.mrb[0].mxu0
  %754 = vmatprep.mubr.f32.mxu0 %v197
  %755 = vmatmul.mubr.f32.gmra.mrb[0].mxu0 %v196
  %v756 = vpop.f32.mrb[0].mxu0
  %v757 = vadd.f32 %v532, %v756
  %v758 = vpop.f32.mrb[0].mxu0
  %759 = vmatprep.mubr.f32.mxu0 %v203
  %760 = vmatmul.mubr.f32.gmra.mrb[0].mxu0 %v202
  %v761 = vpop.f32.mrb[0].mxu0
  %v762 = vadd.f32 %v537, %v761
  %v763 = vpop.f32.mrb[0].mxu0
  %764 = vmatprep.mubr.f32.mxu0 %v209
  %765 = vmatmul.mubr.f32.gmra.mrb[0].mxu0 %v208
  %v766 = vpop.f32.mrb[0].mxu0
  %v767 = vadd.f32 %v542, %v766
  %v768 = vpop.f32.mrb[0].mxu0
  %769 = vmatprep.mubr.f32.mxu0 %v215
  %770 = vmatmul.mubr.f32.gmra.mrb[0].mxu0 %v214
  %v771 = vpop.f32.mrb[0].mxu0
  %v772 = vadd.f32 %v547, %v771
  %v773 = vpop.f32.mrb[0].mxu0
  %774 = vmatprep.mubr.f32.mxu0 %v221
  %775 = vmatmul.mubr.f32.gmra.mrb[0].mxu0 %v220
  %v776 = vpop.f32.mrb[0].mxu0
  %v777 = vadd.f32 %v552, %v776
  %v778 = vpop.f32.mrb[0].mxu0
  %779 = vmatprep.mubr.f32.mxu0 %v227
  %780 = vmatmul.mubr.f32.gmra.mrb[0].mxu0 %v226
  %v781 = vpop.f32.mrb[0].mxu0
  %v782 = vadd.f32 %v557, %v781
  %v783 = vpop.f32.mrb[0].mxu0
  %784 = vmatprep.mubr.f32.mxu0 %v233
  %785 = vmatmul.mubr.f32.gmra.mrb[0].mxu0 %v232
  %v786 = vpop.f32.mrb[0].mxu0
  %v787 = vadd.f32 %v562, %v786
  %v788 = vpop.f32.mrb[0].mxu0
  %789 = vmatprep.mubr.f32.mxu0 %v239
  %790 = vmatmul.mubr.f32.gmra.mrb[0].mxu0 %v238
  %v791 = vpop.f32.mrb[0].mxu0
  %v792 = vadd.f32 %v567, %v791
  %v793 = vpop.f32.mrb[0].mxu0
  %794 = vdwg.mxu0
  %795 = vmatprep.subr.mxu0 0.0
  %796 = vmatpush1.msra.mxu0 %v306
  %797 = vmatprep.subr.mxu0 0.0
  %798 = vmatpush1.msra.mxu0 %v307
  %799 = vmatprep.subr.mxu0 0.0
  %800 = vmatpush1.msra.mxu0 %v308
  %801 = vmatprep.subr.mxu0 0.0
  %802 = vmatpush1.msra.mxu0 %v309
  %803 = vmatprep.subr.mxu0 0.0
  %804 = vmatpush1.msra.mxu0 %v310
  %805 = vmatprep.subr.mxu0 0.0
  %806 = vmatpush1.msra.mxu0 %v311
  %807 = vmatprep.subr.mxu0 0.0
  %808 = vmatpush1.msra.mxu0 %v312
  %809 = vmatprep.subr.mxu0 0.0
  %810 = vmatpush1.msra.mxu0 %v313
  %811 = vmatprep.subr.mxu0 0.0
  %812 = vmatpush1.msra.mxu0 %v314
  %813 = vmatprep.subr.mxu0 0.0
  %814 = vmatpush1.msra.mxu0 %v315
  %815 = vmatprep.subr.mxu0 0.0
  %816 = vmatpush1.msra.mxu0 %v316
  %817 = vmatprep.subr.mxu0 0.0
  %818 = vmatpush1.msra.mxu0 %v317
  %819 = vmatprep.subr.mxu0 0.0
  %820 = vmatpush1.msra.mxu0 %v318
  %821 = vmatprep.subr.mxu0 0.0
  %822 = vmatpush1.msra.mxu0 %v319
  %823 = vmatprep.subr.mxu0 0.0
  %824 = vmatpush1.msra.mxu0 %v320
  %825 = vmatprep.subr.mxu0 0.0
  %826 = vmatpush1.msra.mxu0 %v321
  %827 = vmatprep.subr.mxu0 0.0
  %828 = vmatpush1.msra.mxu0 %v322
  %829 = vmatprep.subr.mxu0 0.0
  %830 = vmatpush1.msra.mxu0 %v323
  %831 = vmatprep.subr.mxu0 0.0
  %832 = vmatpush1.msra.mxu0 %v324
  %833 = vmatprep.subr.mxu0 0.0
  %834 = vmatpush1.msra.mxu0 %v325
  %835 = vmatprep.subr.mxu0 0.0
  %836 = vmatpush1.msra.mxu0 %v326
  %837 = vmatprep.subr.mxu0 0.0
  %838 = vmatpush1.msra.mxu0 %v327
  %839 = vmatprep.subr.mxu0 0.0
  %840 = vmatpush1.msra.mxu0 %v328
  %841 = vmatprep.subr.mxu0 0.0
  %842 = vmatpush1.msra.mxu0 %v329
  %843 = vmatprep.subr.mxu0 0.0
  %844 = vmatpush1.msra.mxu0 %v330
  %845 = vmatprep.subr.mxu0 0.0
  %846 = vmatpush1.msra.mxu0 %v331
  %847 = vmatprep.subr.mxu0 0.0
  %848 = vmatpush1.msra.mxu0 %v332
  %849 = vmatprep.subr.mxu0 0.0
  %850 = vmatpush1.msra.mxu0 %v333
  %851 = vmatprep.subr.mxu0 0.0
  %852 = vmatpush1.msra.mxu0 %v334
  %853 = vmatprep.subr.mxu0 0.0
  %854 = vmatpush1.msra.mxu0 %v335
  %855 = vmatprep.subr.mxu0 0.0
  %856 = vmatpush1.msra.mxu0 %v336
  %857 = vmatprep.subr.mxu0 0.0
  %858 = vmatpush1.msra.mxu0 %v337
  %859 = vmatprep.mubr.f32.mxu0 %v55
  %860 = vmatmul.mubr.f32.gmra.mrb[0].mxu0 %v54
  %v861 = vpop.f32.mrb[0].mxu0
  %v862 = vadd.f32 %v637, %v861
  %v863 = vpop.f32.mrb[0].mxu0
  %864 = vmatprep.mubr.f32.mxu0 %v61
  %865 = vmatmul.mubr.f32.gmra.mrb[0].mxu0 %v60
  %v866 = vpop.f32.mrb[0].mxu0
  %v867 = vadd.f32 %v642, %v866
  %v868 = vpop.f32.mrb[0].mxu0
  %869 = vmatprep.mubr.f32.mxu0 %v67
  %870 = vmatmul.mubr.f32.gmra.mrb[0].mxu0 %v66
  %v871 = vpop.f32.mrb[0].mxu0
  %v872 = vadd.f32 %v647, %v871
  %v873 = vpop.f32.mrb[0].mxu0
  %874 = vmatprep.mubr.f32.mxu0 %v73
  %875 = vmatmul.mubr.f32.gmra.mrb[0].mxu0 %v72
  %v876 = vpop.f32.mrb[0].mxu0
  %v877 = vadd.f32 %v652, %v876
  %v878 = vpop.f32.mrb[0].mxu0
  %879 = vmatprep.mubr.f32.mxu0 %v79
  %880 = vmatmul.mubr.f32.gmra.mrb[0].mxu0 %v78
  %v881 = vpop.f32.mrb[0].mxu0
  %v882 = vadd.f32 %v657, %v881
  %v883 = vpop.f32.mrb[0].mxu0
  %884 = vmatprep.mubr.f32.mxu0 %v85
  %885 = vmatmul.mubr.f32.gmra.mrb[0].mxu0 %v84
  %v886 = vpop.f32.mrb[0].mxu0
  %v887 = vadd.f32 %v662, %v886
  %v888 = vpop.f32.mrb[0].mxu0
  %889 = vmatprep.mubr.f32.mxu0 %v91
  %890 = vmatmul.mubr.f32.gmra.mrb[0].mxu0 %v90
  %v891 = vpop.f32.mrb[0].mxu0
  %v892 = vadd.f32 %v667, %v891
  %v893 = vpop.f32.mrb[0].mxu0
  %894 = vmatprep.mubr.f32.mxu0 %v97
  %895 = vmatmul.mubr.f32.gmra.mrb[0].mxu0 %v96
  %v896 = vpop.f32.mrb[0].mxu0
  %v897 = vadd.f32 %v672, %v896
  %v898 = vpop.f32.mrb[0].mxu0
  %899 = vmatprep.mubr.f32.mxu0 %v103
  %900 = vmatmul.mubr.f32.gmra.mrb[0].mxu0 %v102
  %v901 = vpop.f32.mrb[0].mxu0
  %v902 = vadd.f32 %v677, %v901
  %v903 = vpop.f32.mrb[0].mxu0
  %904 = vmatprep.mubr.f32.mxu0 %v109
  %905 = vmatmul.mubr.f32.gmra.mrb[0].mxu0 %v108
  %v906 = vpop.f32.mrb[0].mxu0
  %v907 = vadd.f32 %v682, %v906
  %v908 = vpop.f32.mrb[0].mxu0
  %909 = vmatprep.mubr.f32.mxu0 %v115
  %910 = vmatmul.mubr.f32.gmra.mrb[0].mxu0 %v114
  %v911 = vpop.f32.mrb[0].mxu0
  %v912 = vadd.f32 %v687, %v911
  %v913 = vpop.f32.mrb[0].mxu0
  %914 = vmatprep.mubr.f32.mxu0 %v121
  %915 = vmatmul.mubr.f32.gmra.mrb[0].mxu0 %v120
  %v916 = vpop.f32.mrb[0].mxu0
  %v917 = vadd.f32 %v692, %v916
  %v918 = vpop.f32.mrb[0].mxu0
  %919 = vmatprep.mubr.f32.mxu0 %v127
  %920 = vmatmul.mubr.f32.gmra.mrb[0].mxu0 %v126
  %v921 = vpop.f32.mrb[0].mxu0
  %v922 = vadd.f32 %v697, %v921
  %v923 = vpop.f32.mrb[0].mxu0
  %924 = vmatprep.mubr.f32.mxu0 %v133
  %925 = vmatmul.mubr.f32.gmra.mrb[0].mxu0 %v132
  %v926 = vpop.f32.mrb[0].mxu0
  %v927 = vadd.f32 %v702, %v926
  %v928 = vpop.f32.mrb[0].mxu0
  %929 = vmatprep.mubr.f32.mxu0 %v139
  %930 = vmatmul.mubr.f32.gmra.mrb[0].mxu0 %v138
  %v931 = vpop.f32.mrb[0].mxu0
  %v932 = vadd.f32 %v707, %v931
  %v933 = vpop.f32.mrb[0].mxu0
  %934 = vmatprep.mubr.f32.mxu0 %v145
  %935 = vmatmul.mubr.f32.gmra.mrb[0].mxu0 %v144
  %v936 = vpop.f32.mrb[0].mxu0
  %v937 = vadd.f32 %v712, %v936
  %v938 = vpop.f32.mrb[0].mxu0
  %939 = vmatprep.mubr.f32.mxu0 %v151
  %940 = vmatmul.mubr.f32.gmra.mrb[0].mxu0 %v150
  %v941 = vpop.f32.mrb[0].mxu0
  %v942 = vadd.f32 %v717, %v941
  %v943 = vpop.f32.mrb[0].mxu0
  %944 = vmatprep.mubr.f32.mxu0 %v157
  %945 = vmatmul.mubr.f32.gmra.mrb[0].mxu0 %v156
  %v946 = vpop.f32.mrb[0].mxu0
  %v947 = vadd.f32 %v722, %v946
  %v948 = vpop.f32.mrb[0].mxu0
  %949 = vmatprep.mubr.f32.mxu0 %v163
  %950 = vmatmul.mubr.f32.gmra.mrb[0].mxu0 %v162
  %v951 = vpop.f32.mrb[0].mxu0
  %v952 = vadd.f32 %v727, %v951
  %v953 = vpop.f32.mrb[0].mxu0
  %954 = vmatprep.mubr.f32.mxu0 %v169
  %955 = vmatmul.mubr.f32.gmra.mrb[0].mxu0 %v168
  %v956 = vpop.f32.mrb[0].mxu0
  %v957 = vadd.f32 %v732, %v956
  %v958 = vpop.f32.mrb[0].mxu0
  %959 = vmatprep.mubr.f32.mxu0 %v175
  %960 = vmatmul.mubr.f32.gmra.mrb[0].mxu0 %v174
  %v961 = vpop.f32.mrb[0].mxu0
  %v962 = vadd.f32 %v737, %v961
  %v963 = vpop.f32.mrb[0].mxu0
  %964 = vmatprep.mubr.f32.mxu0 %v181
  %965 = vmatmul.mubr.f32.gmra.mrb[0].mxu0 %v180
  %v966 = vpop.f32.mrb[0].mxu0
  %v967 = vadd.f32 %v742, %v966
  %v968 = vpop.f32.mrb[0].mxu0
  %969 = vmatprep.mubr.f32.mxu0 %v187
  %970 = vmatmul.mubr.f32.gmra.mrb[0].mxu0 %v186
  %v971 = vpop.f32.mrb[0].mxu0
  %v972 = vadd.f32 %v747, %v971
  %v973 = vpop.f32.mrb[0].mxu0
  %974 = vmatprep.mubr.f32.mxu0 %v193
  %975 = vmatmul.mubr.f32.gmra.mrb[0].mxu0 %v192
  %v976 = vpop.f32.mrb[0].mxu0
  %v977 = vadd.f32 %v752, %v976
  %v978 = vpop.f32.mrb[0].mxu0
  %979 = vmatprep.mubr.f32.mxu0 %v199
  %980 = vmatmul.mubr.f32.gmra.mrb[0].mxu0 %v198
  %v981 = vpop.f32.mrb[0].mxu0
  %v982 = vadd.f32 %v757, %v981
  %v983 = vpop.f32.mrb[0].mxu0
  %984 = vmatprep.mubr.f32.mxu0 %v205
  %985 = vmatmul.mubr.f32.gmra.mrb[0].mxu0 %v204
  %v986 = vpop.f32.mrb[0].mxu0
  %v987 = vadd.f32 %v762, %v986
  %v988 = vpop.f32.mrb[0].mxu0
  %989 = vmatprep.mubr.f32.mxu0 %v211
  %990 = vmatmul.mubr.f32.gmra.mrb[0].mxu0 %v210
  %v991 = vpop.f32.mrb[0].mxu0
  %v992 = vadd.f32 %v767, %v991
  %v993 = vpop.f32.mrb[0].mxu0
  %994 = vmatprep.mubr.f32.mxu0 %v217
  %995 = vmatmul.mubr.f32.gmra.mrb[0].mxu0 %v216
  %v996 = vpop.f32.mrb[0].mxu0
  %v997 = vadd.f32 %v772, %v996
  %v998 = vpop.f32.mrb[0].mxu0
  %999 = vmatprep.mubr.f32.mxu0 %v223
  %1000 = vmatmul.mubr.f32.gmra.mrb[0].mxu0 %v222
  %v1001 = vpop.f32.mrb[0].mxu0
  %v1002 = vadd.f32 %v777, %v1001
  %v1003 = vpop.f32.mrb[0].mxu0
  %1004 = vmatprep.mubr.f32.mxu0 %v229
  %1005 = vmatmul.mubr.f32.gmra.mrb[0].mxu0 %v228
  %v1006 = vpop.f32.mrb[0].mxu0
  %v1007 = vadd.f32 %v782, %v1006
  %v1008 = vpop.f32.mrb[0].mxu0
  %1009 = vmatprep.mubr.f32.mxu0 %v235
  %1010 = vmatmul.mubr.f32.gmra.mrb[0].mxu0 %v234
  %v1011 = vpop.f32.mrb[0].mxu0
  %v1012 = vadd.f32 %v787, %v1011
  %v1013 = vpop.f32.mrb[0].mxu0
  %1014 = vmatprep.mubr.f32.mxu0 %v241
  %1015 = vmatmul.mubr.f32.gmra.mrb[0].mxu0 %v240
  %v1016 = vpop.f32.mrb[0].mxu0
  %v1017 = vadd.f32 %v792, %v1016
  %v1018 = vpop.f32.mrb[0].mxu0
  %1019 = vdwg.mxu0
  %v1020 = vmax.f32 %v862, 0.0
  %v1021 = vmax.f32 %v867, 0.0
  %v1022 = vmax.f32 %v872, 0.0
  %v1023 = vmax.f32 %v877, 0.0
  %v1024 = vmax.f32 %v882, 0.0
  %v1025 = vmax.f32 %v887, 0.0
  %v1026 = vmax.f32 %v892, 0.0
  %v1027 = vmax.f32 %v897, 0.0
  %v1028 = vmax.f32 %v902, 0.0
  %v1029 = vmax.f32 %v907, 0.0
  %v1030 = vmax.f32 %v912, 0.0
  %v1031 = vmax.f32 %v917, 0.0
  %v1032 = vmax.f32 %v922, 0.0
  %v1033 = vmax.f32 %v927, 0.0
  %v1034 = vmax.f32 %v932, 0.0
  %v1035 = vmax.f32 %v937, 0.0
  %v1036 = vmax.f32 %v942, 0.0
  %v1037 = vmax.f32 %v947, 0.0
  %v1038 = vmax.f32 %v952, 0.0
  %v1039 = vmax.f32 %v957, 0.0
  %v1040 = vmax.f32 %v962, 0.0
  %v1041 = vmax.f32 %v967, 0.0
  %v1042 = vmax.f32 %v972, 0.0
  %v1043 = vmax.f32 %v977, 0.0
  %v1044 = vmax.f32 %v982, 0.0
  %v1045 = vmax.f32 %v987, 0.0
  %v1046 = vmax.f32 %v992, 0.0
  %v1047 = vmax.f32 %v997, 0.0
  %v1048 = vmax.f32 %v1002, 0.0
  %v1049 = vmax.f32 %v1007, 0.0
  %v1050 = vmax.f32 %v1012, 0.0
  %v1051 = vmax.f32 %v1017, 0.0
  %v1052 = vld [vmem:[%s3] sm:$0xff]
  %v1053 = vld [vmem:[%s3 + $0x8] sm:$0xff]
  %v1054 = vld [vmem:[%s3 + $0x10] sm:$0xff]
  %v1055 = vld [vmem:[%s3 + $0x18] sm:$0xff]
  %v1056 = vld [vmem:[%s3 + $0x20] sm:$0xff]
  %v1057 = vld [vmem:[%s3 + $0x28] sm:$0xff]
  %v1058 = vld [vmem:[%s3 + $0x30] sm:$0xff]
  %v1059 = vld [vmem:[%s3 + $0x38] sm:$0xff]
  %v1060 = vld [vmem:[%s4] sm:$0xff]
  %v1061 = vld [vmem:[%s4 + $0x8] sm:$0xff]
  %v1062 = vld [vmem:[%s4 + $0x10] sm:$0xff]
  %v1063 = vld [vmem:[%s4 + $0x18] sm:$0xff]
  %v1064 = vld [vmem:[%s4 + $0x20] sm:$0xff]
  %v1065 = vld [vmem:[%s4 + $0x28] sm:$0xff]
  %v1066 = vld [vmem:[%s4 + $0x30] sm:$0xff]
  %v1067 = vld [vmem:[%s4 + $0x38] sm:$0xff]
  %1069 = vset.pattern.permute.xlu0 0
  %1070 = vperm.xlu0 %1069, %v1060
  %v1071 = vpop.permute.xlu0 %1070
  %1074 = vset.pattern.permute.xlu0 0
  %1075 = vperm.xlu0 %1074, %v1061
  %v1076 = vpop.permute.xlu0 %1075
  %1079 = vset.pattern.permute.xlu0 0
  %1080 = vperm.xlu0 %1079, %v1062
  %v1081 = vpop.permute.xlu0 %1080
  %1084 = vset.pattern.permute.xlu0 0
  %1085 = vperm.xlu0 %1084, %v1063
  %v1086 = vpop.permute.xlu0 %1085
  %1089 = vset.pattern.permute.xlu0 0
  %1090 = vperm.xlu0 %1089, %v1064
  %v1091 = vpop.permute.xlu0 %1090
  %1094 = vset.pattern.permute.xlu0 0
  %1095 = vperm.xlu0 %1094, %v1065
  %v1096 = vpop.permute.xlu0 %1095
  %1099 = vset.pattern.permute.xlu0 0
  %1100 = vperm.xlu0 %1099, %v1066
  %v1101 = vpop.permute.xlu0 %1100
  %1104 = vset.pattern.permute.xlu0 0
  %1105 = vperm.xlu0 %1104, %v1067
  %v1106 = vpop.permute.xlu0 %1105
  %1108 = vmatprep.subr.mxu0 0.0
  %1109 = vmatpush1.xpose.msra.mxu0 %v1020
  %1110 = vmatprep.subr.mxu0 0.0
  %1111 = vmatpush1.xpose.msra.mxu0 %v1021
  %1112 = vmatprep.subr.mxu0 0.0
  %1113 = vmatpush1.xpose.msra.mxu0 %v1022
  %1114 = vmatprep.subr.mxu0 0.0
  %1115 = vmatpush1.xpose.msra.mxu0 %v1023
  %1116 = vmatprep.subr.mxu0 0.0
  %1117 = vmatpush1.xpose.msra.mxu0 %v1024
  %1118 = vmatprep.subr.mxu0 0.0
  %1119 = vmatpush1.xpose.msra.mxu0 %v1025
  %1120 = vmatprep.subr.mxu0 0.0
  %1121 = vmatpush1.xpose.msra.mxu0 %v1026
  %1122 = vmatprep.subr.mxu0 0.0
  %1123 = vmatpush1.xpose.msra.mxu0 %v1027
  %1124 = vmatprep.subr.mxu0 0.0
  %1125 = vmatpush1.xpose.msra.mxu0 %v1028
  %1126 = vmatprep.subr.mxu0 0.0
  %1127 = vmatpush1.xpose.msra.mxu0 %v1029
  %1128 = vmatprep.subr.mxu0 0.0
  %1129 = vmatpush1.xpose.msra.mxu0 %v1030
  %1130 = vmatprep.subr.mxu0 0.0
  %1131 = vmatpush1.xpose.msra.mxu0 %v1031
  %1132 = vmatprep.subr.mxu0 0.0
  %1133 = vmatpush1.xpose.msra.mxu0 %v1032
  %1134 = vmatprep.subr.mxu0 0.0
  %1135 = vmatpush1.xpose.msra.mxu0 %v1033
  %1136 = vmatprep.subr.mxu0 0.0
  %1137 = vmatpush1.xpose.msra.mxu0 %v1034
  %1138 = vmatprep.subr.mxu0 0.0
  %1139 = vmatpush1.xpose.msra.mxu0 %v1035
  %1140 = vmatprep.subr.mxu0 0.0
  %1141 = vmatpush1.xpose.msra.mxu0 %v1036
  %1142 = vmatprep.subr.mxu0 0.0
  %1143 = vmatpush1.xpose.msra.mxu0 %v1037
  %1144 = vmatprep.subr.mxu0 0.0
  %1145 = vmatpush1.xpose.msra.mxu0 %v1038
  %1146 = vmatprep.subr.mxu0 0.0
  %1147 = vmatpush1.xpose.msra.mxu0 %v1039
  %1148 = vmatprep.subr.mxu0 0.0
  %1149 = vmatpush1.xpose.msra.mxu0 %v1040
  %1150 = vmatprep.subr.mxu0 0.0
  %1151 = vmatpush1.xpose.msra.mxu0 %v1041
  %1152 = vmatprep.subr.mxu0 0.0
  %1153 = vmatpush1.xpose.msra.mxu0 %v1042
  %1154 = vmatprep.subr.mxu0 0.0
  %1155 = vmatpush1.xpose.msra.mxu0 %v1043
  %1156 = vmatprep.subr.mxu0 0.0
  %1157 = vmatpush1.xpose.msra.mxu0 %v1044
  %1158 = vmatprep.subr.mxu0 0.0
  %1159 = vmatpush1.xpose.msra.mxu0 %v1045
  %1160 = vmatprep.subr.mxu0 0.0
  %1161 = vmatpush1.xpose.msra.mxu0 %v1046
  %1162 = vmatprep.subr.mxu0 0.0
  %1163 = vmatpush1.xpose.msra.mxu0 %v1047
  %1164 = vmatprep.subr.mxu0 0.0
  %1165 = vmatpush1.xpose.msra.mxu0 %v1048
  %1166 = vmatprep.subr.mxu0 0.0
  %1167 = vmatpush1.xpose.msra.mxu0 %v1049
  %1168 = vmatprep.subr.mxu0 0.0
  %1169 = vmatpush1.xpose.msra.mxu0 %v1050
  %1170 = vmatprep.subr.mxu0 0.0
  %1171 = vmatpush1.xpose.msra.mxu0 %v1051
  %1172 = vmatprep.mubr.f32.mxu0 0.0
  %1173 = vmatmul.mubr.f32.gmra.mrb[0].mxu0 %v1052
  %v1174 = vpop.f32.mrb[0].mxu0
  %v1175 = vadd.f32 %v1071, %v1174
  %v1176 = vpop.f32.mrb[0].mxu0
  %v1177 = vadd.f32 %v1071, %v1176
  %1178 = vmatprep.mubr.f32.mxu0 0.0
  %1179 = vmatmul.mubr.f32.gmra.mrb[0].mxu0 %v1053
  %v1180 = vpop.f32.mrb[0].mxu0
  %v1181 = vadd.f32 %v1076, %v1180
  %v1182 = vpop.f32.mrb[0].mxu0
  %v1183 = vadd.f32 %v1076, %v1182
  %1184 = vmatprep.mubr.f32.mxu0 0.0
  %1185 = vmatmul.mubr.f32.gmra.mrb[0].mxu0 %v1054
  %v1186 = vpop.f32.mrb[0].mxu0
  %v1187 = vadd.f32 %v1081, %v1186
  %v1188 = vpop.f32.mrb[0].mxu0
  %v1189 = vadd.f32 %v1081, %v1188
  %1190 = vmatprep.mubr.f32.mxu0 0.0
  %1191 = vmatmul.mubr.f32.gmra.mrb[0].mxu0 %v1055
  %v1192 = vpop.f32.mrb[0].mxu0
  %v1193 = vadd.f32 %v1086, %v1192
  %v1194 = vpop.f32.mrb[0].mxu0
  %v1195 = vadd.f32 %v1086, %v1194
  %1196 = vmatprep.mubr.f32.mxu0 0.0
  %1197 = vmatmul.mubr.f32.gmra.mrb[0].mxu0 %v1056
  %v1198 = vpop.f32.mrb[0].mxu0
  %v1199 = vadd.f32 %v1091, %v1198
  %v1200 = vpop.f32.mrb[0].mxu0
  %v1201 = vadd.f32 %v1091, %v1200
  %1202 = vmatprep.mubr.f32.mxu0 0.0
  %1203 = vmatmul.mubr.f32.gmra.mrb[0].mxu0 %v1057
  %v1204 = vpop.f32.mrb[0].mxu0
  %v1205 = vadd.f32 %v1096, %v1204
  %v1206 = vpop.f32.mrb[0].mxu0
  %v1207 = vadd.f32 %v1096, %v1206
  %1208 = vmatprep.mubr.f32.mxu0 0.0
  %1209 = vmatmul.mubr.f32.gmra.mrb[0].mxu0 %v1058
  %v1210 = vpop.f32.mrb[0].mxu0
  %v1211 = vadd.f32 %v1101, %v1210
  %v1212 = vpop.f32.mrb[0].mxu0
  %v1213 = vadd.f32 %v1101, %v1212
  %1214 = vmatprep.mubr.f32.mxu0 0.0
  %1215 = vmatmul.mubr.f32.gmra.mrb[0].mxu0 %v1059
  %v1216 = vpop.f32.mrb[0].mxu0
  %v1217 = vadd.f32 %v1106, %v1216
  %v1218 = vpop.f32.mrb[0].mxu0
  %v1219 = vadd.f32 %v1106, %v1218
  %1220 = vdwg.mxu0
  %v1221 = vmax.f32 %v1175, 0.0
  %v1222 = vmax.f32 %v1177, 0.0
  %v1223 = vmax.f32 %v1181, 0.0
  %v1224 = vmax.f32 %v1183, 0.0
  %v1225 = vmax.f32 %v1187, 0.0
  %v1226 = vmax.f32 %v1189, 0.0
  %v1227 = vmax.f32 %v1193, 0.0
  %v1228 = vmax.f32 %v1195, 0.0
  %v1229 = vmax.f32 %v1199, 0.0
  %v1230 = vmax.f32 %v1201, 0.0
  %v1231 = vmax.f32 %v1205, 0.0
  %v1232 = vmax.f32 %v1207, 0.0
  %v1233 = vmax.f32 %v1211, 0.0
  %v1234 = vmax.f32 %v1213, 0.0
  %v1235 = vmax.f32 %v1217, 0.0
  %v1236 = vmax.f32 %v1219, 0.0
  %v1237 = vld [vmem:[%s5] sm:$0xff]
  %v1238 = vld [vmem:[%s5 + $0x8] sm:$0xff]
  %v1239 = vld [vmem:[%s5 + $0x10] sm:$0xff]
  %v1240 = vld [vmem:[%s5 + $0x18] sm:$0xff]
  %v1241 = vld [vmem:[%s6] sm:$0xff]
  %v1242 = vld [vmem:[%s6 + $0x8] sm:$0xff]
  %v1243 = vld [vmem:[%s6 + $0x10] sm:$0xff]
  %v1244 = vld [vmem:[%s6 + $0x18] sm:$0xff]
  %1246 = vset.pattern.permute.xlu0 0
  %1247 = vperm.xlu0 %1246, %v1241
  %v1248 = vpop.permute.xlu0 %1247
  %1251 = vset.pattern.permute.xlu0 0
  %1252 = vperm.xlu0 %1251, %v1242
  %v1253 = vpop.permute.xlu0 %1252
  %1256 = vset.pattern.permute.xlu0 0
  %1257 = vperm.xlu0 %1256, %v1243
  %v1258 = vpop.permute.xlu0 %1257
  %1261 = vset.pattern.permute.xlu0 0
  %1262 = vperm.xlu0 %1261, %v1244
  %v1263 = vpop.permute.xlu0 %1262
  %vm1265 = vcmask 523264
  %v1267 = vsel %vm1265, %v1237, 0
  %v1270 = vsel %vm1265, %v1238, 0
  %v1273 = vsel %vm1265, %v1239, 0
  %v1276 = vsel %vm1265, %v1240, 0
  %1278 = vmatprep.subr.mxu0 %v1222
  %1279 = vmatpush1.msra.mxu0 %v1221
  %1280 = vmatprep.subr.mxu0 %v1224
  %1281 = vmatpush1.msra.mxu0 %v1223
  %1282 = vmatprep.subr.mxu0 %v1226
  %1283 = vmatpush1.msra.mxu0 %v1225
  %1284 = vmatprep.subr.mxu0 %v1228
  %1285 = vmatpush1.msra.mxu0 %v1227
  %1286 = vmatprep.subr.mxu0 %v1230
  %1287 = vmatpush1.msra.mxu0 %v1229
  %1288 = vmatprep.subr.mxu0 %v1232
  %1289 = vmatpush1.msra.mxu0 %v1231
  %1290 = vmatprep.subr.mxu0 %v1234
  %1291 = vmatpush1.msra.mxu0 %v1233
  %1292 = vmatprep.subr.mxu0 %v1236
  %1293 = vmatpush1.msra.mxu0 %v1235
  %1294 = vmatprep.subr.mxu0 0.0
  %1295 = vmatpush1.msra.mxu0 0.0
  %1296 = vmatprep.subr.mxu0 0.0
  %1297 = vmatpush1.msra.mxu0 0.0
  %1298 = vmatprep.subr.mxu0 0.0
  %1299 = vmatpush1.msra.mxu0 0.0
  %1300 = vmatprep.subr.mxu0 0.0
  %1301 = vmatpush1.msra.mxu0 0.0
  %1302 = vmatprep.subr.mxu0 0.0
  %1303 = vmatpush1.msra.mxu0 0.0
  %1304 = vmatprep.subr.mxu0 0.0
  %1305 = vmatpush1.msra.mxu0 0.0
  %1306 = vmatprep.subr.mxu0 0.0
  %1307 = vmatpush1.msra.mxu0 0.0
  %1308 = vmatprep.subr.mxu0 0.0
  %1309 = vmatpush1.msra.mxu0 0.0
  %1310 = vmatprep.subr.mxu0 0.0
  %1311 = vmatpush1.msra.mxu0 0.0
  %1312 = vmatprep.subr.mxu0 0.0
  %1313 = vmatpush1.msra.mxu0 0.0
  %1314 = vmatprep.subr.mxu0 0.0
  %1315 = vmatpush1.msra.mxu0 0.0
  %1316 = vmatprep.subr.mxu0 0.0
  %1317 = vmatpush1.msra.mxu0 0.0
  %1318 = vmatprep.subr.mxu0 0.0
  %1319 = vmatpush1.msra.mxu0 0.0
  %1320 = vmatprep.subr.mxu0 0.0
  %1321 = vmatpush1.msra.mxu0 0.0
  %1322 = vmatprep.subr.mxu0 0.0
  %1323 = vmatpush1.msra.mxu0 0.0
  %1324 = vmatprep.subr.mxu0 0.0
  %1325 = vmatpush1.msra.mxu0 0.0
  %1326 = vmatprep.subr.mxu0 0.0
  %1327 = vmatpush1.msra.mxu0 0.0
  %1328 = vmatprep.subr.mxu0 0.0
  %1329 = vmatpush1.msra.mxu0 0.0
  %1330 = vmatprep.subr.mxu0 0.0
  %1331 = vmatpush1.msra.mxu0 0.0
  %1332 = vmatprep.subr.mxu0 0.0
  %1333 = vmatpush1.msra.mxu0 0.0
  %1334 = vmatprep.subr.mxu0 0.0
  %1335 = vmatpush1.msra.mxu0 0.0
  %1336 = vmatprep.subr.mxu0 0.0
  %1337 = vmatpush1.msra.mxu0 0.0
  %1338 = vmatprep.subr.mxu0 0.0
  %1339 = vmatpush1.msra.mxu0 0.0
  %1340 = vmatprep.subr.mxu0 0.0
  %1341 = vmatpush1.msra.mxu0 0.0
  %1342 = vmatprep.mubr.f32.mxu0 0.0
  %1343 = vmatmul.mubr.f32.gmra.mrb[0].mxu0 %v1267
  %v1344 = vpop.f32.mrb[0].mxu0
  %v1345 = vadd.f32 %v1248, %v1344
  %v1346 = vpop.f32.mrb[0].mxu0
  %v1347 = vadd.f32 %v1248, %v1346
  %1348 = vmatprep.mubr.f32.mxu0 0.0
  %1349 = vmatmul.mubr.f32.gmra.mrb[0].mxu0 %v1270
  %v1350 = vpop.f32.mrb[0].mxu0
  %v1351 = vadd.f32 %v1253, %v1350
  %v1352 = vpop.f32.mrb[0].mxu0
  %v1353 = vadd.f32 %v1253, %v1352
  %1354 = vmatprep.mubr.f32.mxu0 0.0
  %1355 = vmatmul.mubr.f32.gmra.mrb[0].mxu0 %v1273
  %v1356 = vpop.f32.mrb[0].mxu0
  %v1357 = vadd.f32 %v1258, %v1356
  %v1358 = vpop.f32.mrb[0].mxu0
  %v1359 = vadd.f32 %v1258, %v1358
  %1360 = vmatprep.mubr.f32.mxu0 0.0
  %1361 = vmatmul.mubr.f32.gmra.mrb[0].mxu0 %v1276
  %v1362 = vpop.f32.mrb[0].mxu0
  %v1363 = vadd.f32 %v1263, %v1362
  %v1364 = vpop.f32.mrb[0].mxu0
  %v1365 = vadd.f32 %v1263, %v1364
  %1366 = vdwg.mxu0
  %v1367 = vmax.f32 %v1345, 0.0
  %v1368 = vmax.f32 %v1347, 0.0
  %v1369 = vmax.f32 %v1351, 0.0
  %v1370 = vmax.f32 %v1353, 0.0
  %v1371 = vmax.f32 %v1357, 0.0
  %v1372 = vmax.f32 %v1359, 0.0
  %v1373 = vmax.f32 %v1363, 0.0
  %v1374 = vmax.f32 %v1365, 0.0
  %v1375 = vld [vmem:[%s7] sm:$0xff]
  %v1376 = vld [vmem:[%s7 + $0x8] sm:$0xff]
  %v1377 = vld [vmem:[%s7 + $0x10] sm:$0xff]
  %v1378 = vld [vmem:[%s7 + $0x18] sm:$0xff]
  %v1379 = vld [vmem:[%s8] sm:$0xff]
  %v1380 = vld [vmem:[%s8 + $0x8] sm:$0xff]
  %v1381 = vld [vmem:[%s8 + $0x10] sm:$0xff]
  %v1382 = vld [vmem:[%s8 + $0x18] sm:$0xff]
  %1384 = vset.pattern.permute.xlu0 0
  %1385 = vperm.xlu0 %1384, %v1379
  %v1386 = vpop.permute.xlu0 %1385
  %1389 = vset.pattern.permute.xlu0 0
  %1390 = vperm.xlu0 %1389, %v1380
  %v1391 = vpop.permute.xlu0 %1390
  %1394 = vset.pattern.permute.xlu0 0
  %1395 = vperm.xlu0 %1394, %v1381
  %v1396 = vpop.permute.xlu0 %1395
  %1399 = vset.pattern.permute.xlu0 0
  %1400 = vperm.xlu0 %1399, %v1382
  %v1401 = vpop.permute.xlu0 %1400
  %vm1403 = vcmask 261120
  %v1405 = vsel %vm1403, %v1375, 0
  %v1408 = vsel %vm1403, %v1376, 0
  %v1411 = vsel %vm1403, %v1377, 0
  %v1414 = vsel %vm1403, %v1378, 0
  %1416 = vmatprep.subr.mxu0 %v1368
  %1417 = vmatpush1.msra.mxu0 %v1367
  %1418 = vmatprep.subr.mxu0 %v1370
  %1419 = vmatpush1.msra.mxu0 %v1369
  %1420 = vmatprep.subr.mxu0 %v1372
  %1421 = vmatpush1.msra.mxu0 %v1371
  %1422 = vmatprep.subr.mxu0 %v1374
  %1423 = vmatpush1.msra.mxu0 %v1373
  %1424 = vmatprep.subr.mxu0 0.0
  %1425 = vmatpush1.msra.mxu0 0.0
  %1426 = vmatprep.subr.mxu0 0.0
  %1427 = vmatpush1.msra.mxu0 0.0
  %1428 = vmatprep.subr.mxu0 0.0
  %1429 = vmatpush1.msra.mxu0 0.0
  %1430 = vmatprep.subr.mxu0 0.0
  %1431 = vmatpush1.msra.mxu0 0.0
  %1432 = vmatprep.subr.mxu0 0.0
  %1433 = vmatpush1.msra.mxu0 0.0
  %1434 = vmatprep.subr.mxu0 0.0
  %1435 = vmatpush1.msra.mxu0 0.0
  %1436 = vmatprep.subr.mxu0 0.0
  %1437 = vmatpush1.msra.mxu0 0.0
  %1438 = vmatprep.subr.mxu0 0.0
  %1439 = vmatpush1.msra.mxu0 0.0
  %1440 = vmatprep.subr.mxu0 0.0
  %1441 = vmatpush1.msra.mxu0 0.0
  %1442 = vmatprep.subr.mxu0 0.0
  %1443 = vmatpush1.msra.mxu0 0.0
  %1444 = vmatprep.subr.mxu0 0.0
  %1445 = vmatpush1.msra.mxu0 0.0
  %1446 = vmatprep.subr.mxu0 0.0
  %1447 = vmatpush1.msra.mxu0 0.0
  %1448 = vmatprep.subr.mxu0 0.0
  %1449 = vmatpush1.msra.mxu0 0.0
  %1450 = vmatprep.subr.mxu0 0.0
  %1451 = vmatpush1.msra.mxu0 0.0
  %1452 = vmatprep.subr.mxu0 0.0
  %1453 = vmatpush1.msra.mxu0 0.0
  %1454 = vmatprep.subr.mxu0 0.0
  %1455 = vmatpush1.msra.mxu0 0.0
  %1456 = vmatprep.subr.mxu0 0.0
  %1457 = vmatpush1.msra.mxu0 0.0
  %1458 = vmatprep.subr.mxu0 0.0
  %1459 = vmatpush1.msra.mxu0 0.0
  %1460 = vmatprep.subr.mxu0 0.0
  %1461 = vmatpush1.msra.mxu0 0.0
  %1462 = vmatprep.subr.mxu0 0.0
  %1463 = vmatpush1.msra.mxu0 0.0
  %1464 = vmatprep.subr.mxu0 0.0
  %1465 = vmatpush1.msra.mxu0 0.0
  %1466 = vmatprep.subr.mxu0 0.0
  %1467 = vmatpush1.msra.mxu0 0.0
  %1468 = vmatprep.subr.mxu0 0.0
  %1469 = vmatpush1.msra.mxu0 0.0
  %1470 = vmatprep.subr.mxu0 0.0
  %1471 = vmatpush1.msra.mxu0 0.0
  %1472 = vmatprep.subr.mxu0 0.0
  %1473 = vmatpush1.msra.mxu0 0.0
  %1474 = vmatprep.subr.mxu0 0.0
  %1475 = vmatpush1.msra.mxu0 0.0
  %1476 = vmatprep.subr.mxu0 0.0
  %1477 = vmatpush1.msra.mxu0 0.0
  %1478 = vmatprep.subr.mxu0 0.0
  %1479 = vmatpush1.msra.mxu0 0.0
  %1480 = vmatprep.mubr.f32.mxu0 0.0
  %1481 = vmatmul.mubr.f32.gmra.mrb[0].mxu0 %v1405
  %v1482 = vpop.f32.mrb[0].mxu0
  %v1483 = vadd.f32 %v1386, %v1482
  %v1484 = vpop.f32.mrb[0].mxu0
  %v1485 = vadd.f32 %v1386, %v1484
  %1486 = vmatprep.mubr.f32.mxu0 0.0
  %1487 = vmatmul.mubr.f32.gmra.mrb[0].mxu0 %v1408
  %v1488 = vpop.f32.mrb[0].mxu0
  %v1489 = vadd.f32 %v1391, %v1488
  %v1490 = vpop.f32.mrb[0].mxu0
  %v1491 = vadd.f32 %v1391, %v1490
  %1492 = vmatprep.mubr.f32.mxu0 0.0
  %1493 = vmatmul.mubr.f32.gmra.mrb[0].mxu0 %v1411
  %v1494 = vpop.f32.mrb[0].mxu0
  %v1495 = vadd.f32 %v1396, %v1494
  %v1496 = vpop.f32.mrb[0].mxu0
  %v1497 = vadd.f32 %v1396, %v1496
  %1498 = vmatprep.mubr.f32.mxu0 0.0
  %1499 = vmatmul.mubr.f32.gmra.mrb[0].mxu0 %v1414
  %v1500 = vpop.f32.mrb[0].mxu0
  %v1501 = vadd.f32 %v1401, %v1500
  %v1502 = vpop.f32.mrb[0].mxu0
  %v1503 = vadd.f32 %v1401, %v1502
  %1504 = vdwg.mxu0
  %v1505 = vmax.f32 %v1483, 0.0
  %v1506 = vmax.f32 %v1485, 0.0
  %v1507 = vmax.f32 %v1489, 0.0
  %v1508 = vmax.f32 %v1491, 0.0
  %v1509 = vmax.f32 %v1495, 0.0
  %v1510 = vmax.f32 %v1497, 0.0
  %v1511 = vmax.f32 %v1501, 0.0
  %v1512 = vmax.f32 %v1503, 0.0
  %v1513 = vld [vmem:[%s9] sm:$0xff]
  %v1514 = vld [vmem:[%s9 + $0x8] sm:$0xff]
  %v1515 = vld [vmem:[%s10] sm:$0xff]
  %v1516 = vld [vmem:[%s10 + $0x8] sm:$0xff]
  %1518 = vset.pattern.permute.xlu0 0
  %1519 = vperm.xlu0 %1518, %v1515
  %v1520 = vpop.permute.xlu0 %1519
  %1523 = vset.pattern.permute.xlu0 0
  %1524 = vperm.xlu0 %1523, %v1516
  %v1525 = vpop.permute.xlu0 %1524
  %v1528 = vsel %vm1403, %v1513, 0
  %v1531 = vsel %vm1403, %v1514, 0
  %1533 = vmatprep.subr.mxu0 %v1506
  %1534 = vmatpush1.msra.mxu0 %v1505
  %1535 = vmatprep.subr.mxu0 %v1508
  %1536 = vmatpush1.msra.mxu0 %v1507
  %1537 = vmatprep.subr.mxu0 %v1510
  %1538 = vmatpush1.msra.mxu0 %v1509
  %1539 = vmatprep.subr.mxu0 %v1512
  %1540 = vmatpush1.msra.mxu0 %v1511
  %1541 = vmatprep.subr.mxu0 0.0
  %1542 = vmatpush1.msra.mxu0 0.0
  %1543 = vmatprep.subr.mxu0 0.0
  %1544 = vmatpush1.msra.mxu0 0.0
  %1545 = vmatprep.subr.mxu0 0.0
  %1546 = vmatpush1.msra.mxu0 0.0
  %1547 = vmatprep.subr.mxu0 0.0
  %1548 = vmatpush1.msra.mxu0 0.0
  %1549 = vmatprep.subr.mxu0 0.0
  %1550 = vmatpush1.msra.mxu0 0.0
  %1551 = vmatprep.subr.mxu0 0.0
  %1552 = vmatpush1.msra.mxu0 0.0
  %1553 = vmatprep.subr.mxu0 0.0
  %1554 = vmatpush1.msra.mxu0 0.0
  %1555 = vmatprep.subr.mxu0 0.0
  %1556 = vmatpush1.msra.mxu0 0.0
  %1557 = vmatprep.subr.mxu0 0.0
  %1558 = vmatpush1.msra.mxu0 0.0
  %1559 = vmatprep.subr.mxu0 0.0
  %1560 = vmatpush1.msra.mxu0 0.0
  %1561 = vmatprep.subr.mxu0 0.0
  %1562 = vmatpush1.msra.mxu0 0.0
  %1563 = vmatprep.subr.mxu0 0.0
  %1564 = vmatpush1.msra.mxu0 0.0
  %1565 = vmatprep.subr.mxu0 0.0
  %1566 = vmatpush1.msra.mxu0 0.0
  %1567 = vmatprep.subr.mxu0 0.0
  %1568 = vmatpush1.msra.mxu0 0.0
  %1569 = vmatprep.subr.mxu0 0.0
  %1570 = vmatpush1.msra.mxu0 0.0
  %1571 = vmatprep.subr.mxu0 0.0
  %1572 = vmatpush1.msra.mxu0 0.0
  %1573 = vmatprep.subr.mxu0 0.0
  %1574 = vmatpush1.msra.mxu0 0.0
  %1575 = vmatprep.subr.mxu0 0.0
  %1576 = vmatpush1.msra.mxu0 0.0
  %1577 = vmatprep.subr.mxu0 0.0
  %1578 = vmatpush1.msra.mxu0 0.0
  %1579 = vmatprep.subr.mxu0 0.0
  %1580 = vmatpush1.msra.mxu0 0.0
  %1581 = vmatprep.subr.mxu0 0.0
  %1582 = vmatpush1.msra.mxu0 0.0
  %1583 = vmatprep.subr.mxu0 0.0
  %1584 = vmatpush1.msra.mxu0 0.0
  %1585 = vmatprep.subr.mxu0 0.0
  %1586 = vmatpush1.msra.mxu0 0.0
  %1587 = vmatprep.subr.mxu0 0.0
  %1588 = vmatpush1.msra.mxu0 0.0
  %1589 = vmatprep.subr.mxu0 0.0
  %1590 = vmatpush1.msra.mxu0 0.0
  %1591 = vmatprep.subr.mxu0 0.0
  %1592 = vmatpush1.msra.mxu0 0.0
  %1593 = vmatprep.subr.mxu0 0.0
  %1594 = vmatpush1.msra.mxu0 0.0
  %1595 = vmatprep.subr.mxu0 0.0
  %1596 = vmatpush1.msra.mxu0 0.0
  %1597 = vmatprep.mubr.f32.mxu0 0.0
  %1598 = vmatmul.mubr.f32.gmra.mrb[0].mxu0 %v1528
  %v1599 = vpop.f32.mrb[0].mxu0
  %v1600 = vadd.f32 %v1520, %v1599
  %v1601 = vpop.f32.mrb[0].mxu0
  %v1602 = vadd.f32 %v1520, %v1601
  %1603 = vmatprep.mubr.f32.mxu0 0.0
  %1604 = vmatmul.mubr.f32.gmra.mrb[0].mxu0 %v1531
  %v1605 = vpop.f32.mrb[0].mxu0
  %v1606 = vadd.f32 %v1525, %v1605
  %v1607 = vpop.f32.mrb[0].mxu0
  %v1608 = vadd.f32 %v1525, %v1607
  %1609 = vdwg.mxu0
  %v1610 = vmax.f32 %v1600, 0.0
  %v1611 = vmax.f32 %v1602, 0.0
  %v1612 = vmax.f32 %v1606, 0.0
  %v1613 = vmax.f32 %v1608, 0.0
  %v1614 = vld [vmem:[%s11] sm:$0xff]
  %v1615 = vld [vmem:[%s11 + $0x8] sm:$0xff]
  %v1616 = vld [vmem:[%s12] sm:$0xff]
  %v1617 = vld [vmem:[%s12 + $0x8] sm:$0xff]
  %1619 = vset.pattern.permute.xlu0 0
  %1620 = vperm.xlu0 %1619, %v1616
  %v1621 = vpop.permute.xlu0 %1620
  %1624 = vset.pattern.permute.xlu0 0
  %1625 = vperm.xlu0 %1624, %v1617
  %v1626 = vpop.permute.xlu0 %1625
  %vm1628 = vcmask 130048
  %v1630 = vsel %vm1628, %v1614, 0
  %v1633 = vsel %vm1628, %v1615, 0
  %1635 = vmatprep.subr.mxu0 %v1611
  %1636 = vmatpush1.msra.mxu0 %v1610
  %1637 = vmatprep.subr.mxu0 %v1613
  %1638 = vmatpush1.msra.mxu0 %v1612
  %1639 = vmatprep.subr.mxu0 0.0
  %1640 = vmatpush1.msra.mxu0 0.0
  %1641 = vmatprep.subr.mxu0 0.0
  %1642 = vmatpush1.msra.mxu0 0.0
  %1643 = vmatprep.subr.mxu0 0.0
  %1644 = vmatpush1.msra.mxu0 0.0
  %1645 = vmatprep.subr.mxu0 0.0
  %1646 = vmatpush1.msra.mxu0 0.0
  %1647 = vmatprep.subr.mxu0 0.0
  %1648 = vmatpush1.msra.mxu0 0.0
  %1649 = vmatprep.subr.mxu0 0.0
  %1650 = vmatpush1.msra.mxu0 0.0
  %1651 = vmatprep.subr.mxu0 0.0
  %1652 = vmatpush1.msra.mxu0 0.0
  %1653 = vmatprep.subr.mxu0 0.0
  %1654 = vmatpush1.msra.mxu0 0.0
  %1655 = vmatprep.subr.mxu0 0.0
  %1656 = vmatpush1.msra.mxu0 0.0
  %1657 = vmatprep.subr.mxu0 0.0
  %1658 = vmatpush1.msra.mxu0 0.0
  %1659 = vmatprep.subr.mxu0 0.0
  %1660 = vmatpush1.msra.mxu0 0.0
  %1661 = vmatprep.subr.mxu0 0.0
  %1662 = vmatpush1.msra.mxu0 0.0
  %1663 = vmatprep.subr.mxu0 0.0
  %1664 = vmatpush1.msra.mxu0 0.0
  %1665 = vmatprep.subr.mxu0 0.0
  %1666 = vmatpush1.msra.mxu0 0.0
  %1667 = vmatprep.subr.mxu0 0.0
  %1668 = vmatpush1.msra.mxu0 0.0
  %1669 = vmatprep.subr.mxu0 0.0
  %1670 = vmatpush1.msra.mxu0 0.0
  %1671 = vmatprep.subr.mxu0 0.0
  %1672 = vmatpush1.msra.mxu0 0.0
  %1673 = vmatprep.subr.mxu0 0.0
  %1674 = vmatpush1.msra.mxu0 0.0
  %1675 = vmatprep.subr.mxu0 0.0
  %1676 = vmatpush1.msra.mxu0 0.0
  %1677 = vmatprep.subr.mxu0 0.0
  %1678 = vmatpush1.msra.mxu0 0.0
  %1679 = vmatprep.subr.mxu0 0.0
  %1680 = vmatpush1.msra.mxu0 0.0
  %1681 = vmatprep.subr.mxu0 0.0
  %1682 = vmatpush1.msra.mxu0 0.0
  %1683 = vmatprep.subr.mxu0 0.0
  %1684 = vmatpush1.msra.mxu0 0.0
  %1685 = vmatprep.subr.mxu0 0.0
  %1686 = vmatpush1.msra.mxu0 0.0
  %1687 = vmatprep.subr.mxu0 0.0
  %1688 = vmatpush1.msra.mxu0 0.0
  %1689 = vmatprep.subr.mxu0 0.0
  %1690 = vmatpush1.msra.mxu0 0.0
  %1691 = vmatprep.subr.mxu0 0.0
  %1692 = vmatpush1.msra.mxu0 0.0
  %1693 = vmatprep.subr.mxu0 0.0
  %1694 = vmatpush1.msra.mxu0 0.0
  %1695 = vmatprep.subr.mxu0 0.0
  %1696 = vmatpush1.msra.mxu0 0.0
  %1697 = vmatprep.subr.mxu0 0.0
  %1698 = vmatpush1.msra.mxu0 0.0
  %1699 = vmatprep.mubr.f32.mxu0 0.0
  %1700 = vmatmul.mubr.f32.gmra.mrb[0].mxu0 %v1630
  %v1701 = vpop.f32.mrb[0].mxu0
  %v1702 = vadd.f32 %v1621, %v1701
  %v1703 = vpop.f32.mrb[0].mxu0
  %v1704 = vadd.f32 %v1621, %v1703
  %1705 = vmatprep.mubr.f32.mxu0 0.0
  %1706 = vmatmul.mubr.f32.gmra.mrb[0].mxu0 %v1633
  %v1707 = vpop.f32.mrb[0].mxu0
  %v1708 = vadd.f32 %v1626, %v1707
  %v1709 = vpop.f32.mrb[0].mxu0
  %v1710 = vadd.f32 %v1626, %v1709
  %1711 = vdwg.mxu0
  %v1712 = vmax.f32 %v1702, 0.0
  %v1713 = vmax.f32 %v1704, 0.0
  %v1714 = vmax.f32 %v1708, 0.0
  %v1715 = vmax.f32 %v1710, 0.0
  %v1716 = vld [vmem:[%s13] sm:$0xff]
  %v1717 = vld [vmem:[%s14] sm:$0xff]
  %1719 = vset.pattern.permute.xlu0 0
  %1720 = vperm.xlu0 %1719, %v1717
  %v1721 = vpop.permute.xlu0 %1720
  %v1724 = vsel %vm1628, %v1716, 0
  %1726 = vmatprep.subr.mxu0 %v1713
  %1727 = vmatpush1.msra.mxu0 %v1712
  %1728 = vmatprep.subr.mxu0 %v1715
  %1729 = vmatpush1.msra.mxu0 %v1714
  %1730 = vmatprep.subr.mxu0 0.0
  %1731 = vmatpush1.msra.mxu0 0.0
  %1732 = vmatprep.subr.mxu0 0.0
  %1733 = vmatpush1.msra.mxu0 0.0
  %1734 = vmatprep.subr.mxu0 0.0
  %1735 = vmatpush1.msra.mxu0 0.0
  %1736 = vmatprep.subr.mxu0 0.0
  %1737 = vmatpush1.msra.mxu0 0.0
  %1738 = vmatprep.subr.mxu0 0.0
  %1739 = vmatpush1.msra.mxu0 0.0
  %1740 = vmatprep.subr.mxu0 0.0
  %1741 = vmatpush1.msra.mxu0 0.0
  %1742 = vmatprep.subr.mxu0 0.0
  %1743 = vmatpush1.msra.mxu0 0.0
  %1744 = vmatprep.subr.mxu0 0.0
  %1745 = vmatpush1.msra.mxu0 0.0
  %1746 = vmatprep.subr.mxu0 0.0
  %1747 = vmatpush1.msra.mxu0 0.0
  %1748 = vmatprep.subr.mxu0 0.0
  %1749 = vmatpush1.msra.mxu0 0.0
  %1750 = vmatprep.subr.mxu0 0.0
  %1751 = vmatpush1.msra.mxu0 0.0
  %1752 = vmatprep.subr.mxu0 0.0
  %1753 = vmatpush1.msra.mxu0 0.0
  %1754 = vmatprep.subr.mxu0 0.0
  %1755 = vmatpush1.msra.mxu0 0.0
  %1756 = vmatprep.subr.mxu0 0.0
  %1757 = vmatpush1.msra.mxu0 0.0
  %1758 = vmatprep.subr.mxu0 0.0
  %1759 = vmatpush1.msra.mxu0 0.0
  %1760 = vmatprep.subr.mxu0 0.0
  %1761 = vmatpush1.msra.mxu0 0.0
  %1762 = vmatprep.subr.mxu0 0.0
  %1763 = vmatpush1.msra.mxu0 0.0
  %1764 = vmatprep.subr.mxu0 0.0
  %1765 = vmatpush1.msra.mxu0 0.0
  %1766 = vmatprep.subr.mxu0 0.0
  %1767 = vmatpush1.msra.mxu0 0.0
  %1768 = vmatprep.subr.mxu0 0.0
  %1769 = vmatpush1.msra.mxu0 0.0
  %1770 = vmatprep.subr.mxu0 0.0
  %1771 = vmatpush1.msra.mxu0 0.0
  %1772 = vmatprep.subr.mxu0 0.0
  %1773 = vmatpush1.msra.mxu0 0.0
  %1774 = vmatprep.subr.mxu0 0.0
  %1775 = vmatpush1.msra.mxu0 0.0
  %1776 = vmatprep.subr.mxu0 0.0
  %1777 = vmatpush1.msra.mxu0 0.0
  %1778 = vmatprep.subr.mxu0 0.0
  %1779 = vmatpush1.msra.mxu0 0.0
  %1780 = vmatprep.subr.mxu0 0.0
  %1781 = vmatpush1.msra.mxu0 0.0
  %1782 = vmatprep.subr.mxu0 0.0
  %1783 = vmatpush1.msra.mxu0 0.0
  %1784 = vmatprep.subr.mxu0 0.0
  %1785 = vmatpush1.msra.mxu0 0.0
  %1786 = vmatprep.subr.mxu0 0.0
  %1787 = vmatpush1.msra.mxu0 0.0
  %1788 = vmatprep.subr.mxu0 0.0
  %1789 = vmatpush1.msra.mxu0 0.0
  %1790 = vmatprep.mubr.f32.mxu0 0.0
  %1791 = vmatmul.mubr.f32.gmra.mrb[0].mxu0 %v1724
  %v1792 = vpop.f32.mrb[0].mxu0
  %v1793 = vadd.f32 %v1721, %v1792
  %v1794 = vpop.f32.mrb[0].mxu0
  %v1795 = vadd.f32 %v1721, %v1794
  %1796 = vdwg.mxu0
  %v1799 = vcombine.low %v1793, %v1795
  %v1801 = vunpack.c.l.s4 1966171168
  %v1802 = vunpack.c.0.s8 %v1801
  %v1803 = vlaneseq
  %v1804 = vshrl.u32 %v1803, 7
  %v1805 = vsub.s32 %v1802, %v1804
  %v1806 = vrot.slane %v1799, %v1805
  %v1808 = vunpack.c.l.s4 1966171168
  %v1809 = vunpack.c.0.s8 %v1808
  %v1810 = vlaneseq
  %v1811 = vshrl.u32 %v1810, 7
  %v1812 = vsub.s32 %v1809, %v1811
  %v1813 = vrot.slane %v1806, %v1812
  %v1815 = vlaneseq
  %vm1816 = vcmp.ge.s32.totalorder %v1815, 0
  %vm1817 = vcmp.lt.s32.totalorder %v1815, 256
  %vm1818 = vmand %vm1816, %vm1817
  %1819 = vst.msk [vmem:[%s15] sm:$0x3] %vm1818, %v1813
  // Predicated region
  $region62: #{chess_net_forward.1} parent=0 // pred_check
    _
  $region63: #{chess_net_forward.1} parent=0 // pred_check_branch
    %1821 = sbr.rel (0) target = $region65
  $region64: #{chess_net_forward.1} parent=0 // pred_region
    _
  $region65: #{chess_net_forward.1} parent=0 // pred_fallthru
    _
  // Predicated region
  $region66: #{chess_net_forward.1} parent=0 // pred_check
    _
  $region67: #{chess_net_forward.1} parent=0 // pred_check_branch
    %1823 = sbr.rel (0) target = $region69
  $region68: #{chess_net_forward.1} parent=0 // pred_region
    _
  $region69: #{chess_net_forward.1} parent=0 // pred_fallthru
    _

</llo_original>
